<compile_context>
chip_gen: v5e
topology: v5e:2x2
jax: 0.10.0
libtpu: 0.0.40
codegen_flags: <defaults>
</compile_context>

<pallas_src>
import jax
import jax.numpy as jnp
from jax.experimental import pallas as pl
from jax.experimental.pallas import tpu as pltpu


_TM_MAX = 512                       # bounded row tile for the patch matrix
_VMEM_LIMIT = 32 * 1024 * 1024      # explicit scoped-VMEM budget; safe on v5e/v6e/v7x


# ----------------------------------------------------------------------------- kernels
def _silu(y):
    """Numerically-stable SiLU in f32: y * sigmoid(y); reciprocal runs on the EUP slot."""
    t = jnp.exp(-jnp.abs(y))                       # in (0, 1], never overflows
    r = pl.reciprocal(1.0 + t, approx=True)
    return y * jnp.where(y >= 0.0, r, t * r)


def _make_fused_conv_kernel(n_in, has_residual):
    """SiLU(sum_i p_i @ w_i + shift) [+ residual].  Weights carry the folded BN scale."""
    def kernel(*refs):
        p_refs = refs[:n_in]
        w_refs = refs[n_in:2 * n_in]
        shift_ref = refs[2 * n_in]
        r_ref = refs[2 * n_in + 1] if has_residual else None
        o_ref = refs[-1]

        y = jnp.dot(p_refs[0][...], w_refs[0][...], preferred_element_type=jnp.float32)
        for t in range(1, n_in):                   # K-split branches (concat elimination)
            y = y + jnp.dot(p_refs[t][...], w_refs[t][...],
                            preferred_element_type=jnp.float32)
        y = _silu(y + shift_ref[...])
        if has_residual:                           # Bottleneck skip, fused post-SiLU
            y = y + r_ref[...].astype(jnp.float32)
        o_ref[...] = y.astype(o_ref.dtype)
    return kernel


def _dual_conv_kernel(x_ref, wa_ref, wb_ref, sa_ref, sb_ref, oa_ref, ob_ref):
    """Two 1x1 CBLs sharing one input read (C3's c1 + c_skipped fused)."""
    x = x_ref[...]
    ya = jnp.dot(x, wa_ref[...], preferred_element_type=jnp.float32) + sa_ref[...]
    oa_ref[...] = _silu(ya).astype(oa_ref.dtype)
    yb = jnp.dot(x, wb_ref[...], preferred_element_type=jnp.float32) + sb_ref[...]
    ob_ref[...] = _silu(yb).astype(ob_ref.dtype)


def _sppf_pool_kernel(x_ref, p1_ref, p2_ref, p3_ref):
    """Three chained MaxPool2d(5,1,2) in one kernel, each as a separable 5x1 + 1x5 max.

    x_ref holds one batch element padded by 6 with -inf on H and W; chained *valid* pools
    on that halo are exactly equivalent to chained pad-2 pools on the original tensor
    (halo values are maxes over subsets of data already inside the legitimate windows).
    """
    x = x_ref[...]
    h, w = p1_ref.shape[1], p1_ref.shape[2]

    def pool5_valid(v):
        hh = v.shape[1] - 4
        a = v[:, 0:hh]
        for d in range(1, 5):
            a = jnp.maximum(a, v[:, d:d + hh])
        ww = v.shape[2] - 4
        b = a[:, :, 0:ww]
        for d in range(1, 5):
            b = jnp.maximum(b, a[:, :, d:d + ww])
        return b

    q1 = pool5_valid(x)          # (1, h+8, w+8, c)
    q2 = pool5_valid(q1)         # (1, h+4, w+4, c)
    q3 = pool5_valid(q2)         # (1, h,   w,   c)
    p1_ref[...] = q1[:, 4:4 + h, 4:4 + w]
    p2_ref[...] = q2[:, 2:2 + h, 2:2 + w]
    p3_ref[...] = q3


# ------------------------------------------------------------------------------- glue
def _choose_tm(m):
    """Bounded row tile: multiple of 8, <= _TM_MAX, and >= 2 grid steps when possible."""
    if m > _TM_MAX:
        return _TM_MAX
    half = max(8, (((m + 1) // 2) + 7) // 8 * 8)
    return min(half, m)


def _pad_rows(a, m_pad):
    m = a.shape[0]
    if m == m_pad:
        return a
    return jnp.pad(a, ((0, m_pad - m), (0, 0)))


def _im2col(x, kh, kw, stride, pad):
    """NHWC (bf16) -> (N*OH*OW, kh*kw*Cin) patch matrix (row order matches weight reshape)."""
    n, h, w, c = x.shape
    xp = jnp.pad(x, ((0, 0), (pad, pad), (pad, pad), (0, 0)))
    oh = (h + 2 * pad - kh) // stride + 1
    ow = (w + 2 * pad - kw) // stride + 1
    cols = []
    for i in range(kh):
        for j in range(kw):
            cols.append(xp[:, i:i + stride * oh:stride, j:j + stride * ow:stride, :])
    patches = jnp.stack(cols, axis=3)                       # (N, OH, OW, kh*kw, C)
    return patches.reshape(n * oh * ow, kh * kw * c), oh, ow


def fused_conv(branches, weights, shift, cout, residual=None):
    """Fused CBL on flattened rows: SiLU(sum_i branches[i] @ weights[i] + shift) [+ residual].

    branches[i]: (m, K_i) bf16; weights[i]: (K_i, cout) bf16 (BN scale folded);
    shift: (1, cout) f32; residual: optional (m, cout).  Returns (m, cout) bf16.
    """
    m = branches[0].shape[0]
    n_in = len(branches)
    tm = _choose_tm(m)
    m_pad = ((m + tm - 1) // tm) * tm
    grid = (m_pad // tm,)

    branches = [_pad_rows(b.astype(jnp.bfloat16), m_pad) for b in branches]
    weights = [w.astype(jnp.bfloat16) for w in weights]
    args = branches + weights + [shift]
    in_specs = ([pl.BlockSpec((tm, b.shape[1]), lambda i: (i, 0)) for b in branches]
                + [pl.BlockSpec(w.shape, lambda i: (0, 0)) for w in weights]
                + [pl.BlockSpec((1, cout), lambda i: (0, 0))])
    has_res = residual is not None
    if has_res:
        args.append(_pad_rows(residual, m_pad))
        in_specs.append(pl.BlockSpec((tm, cout), lambda i: (i, 0)))

    y = pl.pallas_call(
        _make_fused_conv_kernel(n_in, has_res),
        out_shape=jax.ShapeDtypeStruct((m_pad, cout), jnp.bfloat16),
        grid_spec=pltpu.PrefetchScalarGridSpec(
            num_scalar_prefetch=0, grid=grid,
            in_specs=in_specs,
            out_specs=pl.BlockSpec((tm, cout), lambda i: (i, 0))),
        compiler_params=pltpu.CompilerParams(
            dimension_semantics=("parallel",),
            vmem_limit_bytes=_VMEM_LIMIT),
    )(*args)
    return y[:m] if m_pad != m else y


def dual_conv_1x1(x2d, wa, sa, wb, sb):
    """Two 1x1 CBLs applied to the same (m, cin) input, one kernel, two outputs."""
    m, cin = x2d.shape
    ca, cb = wa.shape[1], wb.shape[1]
    tm = _choose_tm(m)
    m_pad = ((m + tm - 1) // tm) * tm
    grid = (m_pad // tm,)
    x2d = _pad_rows(x2d.astype(jnp.bfloat16), m_pad)

    a, b = pl.pallas_call(
        _dual_conv_kernel,
        out_shape=(jax.ShapeDtypeStruct((m_pad, ca), jnp.bfloat16),
                   jax.ShapeDtypeStruct((m_pad, cb), jnp.bfloat16)),
        grid_spec=pltpu.PrefetchScalarGridSpec(
            num_scalar_prefetch=0, grid=grid,
            in_specs=[pl.BlockSpec((tm, cin), lambda i: (i, 0)),
                      pl.BlockSpec(wa.shape, lambda i: (0, 0)),
                      pl.BlockSpec(wb.shape, lambda i: (0, 0)),
                      pl.BlockSpec(sa.shape, lambda i: (0, 0)),
                      pl.BlockSpec(sb.shape, lambda i: (0, 0))],
            out_specs=[pl.BlockSpec((tm, ca), lambda i: (i, 0)),
                       pl.BlockSpec((tm, cb), lambda i: (i, 0))]),
        compiler_params=pltpu.CompilerParams(
            dimension_semantics=("parallel",),
            vmem_limit_bytes=_VMEM_LIMIT),
    )(x2d, wa.astype(jnp.bfloat16), wb.astype(jnp.bfloat16), sa, sb)
    if m_pad != m:
        a, b = a[:m], b[:m]
    return a, b


def sppf_pool_chain(x):
    """p1 = pool5(x), p2 = pool5(p1), p3 = pool5(p2)  with MaxPool2d(5, 1, 2) semantics."""
    n, h, w, c = x.shape
    xp = jnp.pad(x, ((0, 0), (6, 6), (6, 6), (0, 0)), constant_values=-jnp.inf)
    out = jax.ShapeDtypeStruct((n, h, w, c), x.dtype)
    return pl.pallas_call(
        _sppf_pool_kernel,
        out_shape=(out, out, out),
        grid_spec=pltpu.PrefetchScalarGridSpec(
            num_scalar_prefetch=0, grid=(n,),
            in_specs=[pl.BlockSpec((1, h + 12, w + 12, c), lambda i: (i, 0, 0, 0))],
            out_specs=[pl.BlockSpec((1, h, w, c), lambda i: (i, 0, 0, 0))] * 3),
        compiler_params=pltpu.CompilerParams(
            dimension_semantics=("parallel",),
            vmem_limit_bytes=_VMEM_LIMIT),
    )(xp)


# --------------------------------------------------------------------- parameter init
def init_cbl(key, cin, cout, k, stride, padding):
    kw_, kg, kb, km, kv = jax.random.split(key, 5)
    w = 0.1 * jax.random.normal(kw_, (k, k, cin, cout), jnp.float32)
    gamma = 1.0 + 0.1 * jax.random.normal(kg, (cout,), jnp.float32)
    beta = 0.05 * jax.random.normal(kb, (cout,), jnp.float32)
    mean = 0.05 * jax.random.normal(km, (cout,), jnp.float32)
    var = 1.0 + 0.1 * jnp.abs(jax.random.normal(kv, (cout,), jnp.float32))
    eps = 1e-3                                               # BatchNorm2d(eps=0.001)
    scale = gamma / jnp.sqrt(var + eps)
    shift = beta - mean * scale
    # Fold the BN scale into the weights (f32), then cast to bf16 for the MXU.
    w2d = (w.reshape(k * k * cin, cout) * scale[None, :]).astype(jnp.bfloat16)
    return {"w2d": w2d, "shift": shift.reshape(1, cout).astype(jnp.float32),
            "k": k, "stride": stride, "padding": padding, "cin": cin, "cout": cout}


def init_bottleneck(key, cin, cout, width_multiple=1):
    c_ = int(width_multiple * cin)
    k1, k2 = jax.random.split(key, 2)
    return {"c1": init_cbl(k1, cin, c_, 1, 1, 0),
            "c2": init_cbl(k2, c_, cout, 3, 1, 1)}


def init_c3(key, cin, cout, width_multiple, depth):
    c_ = int(width_multiple * cin)
    keys = jax.random.split(key, depth + 3)
    c1 = init_cbl(keys[0], cin, c_, 1, 1, 0)
    cs = init_cbl(keys[1], cin, c_, 1, 1, 0)
    c_out = init_cbl(keys[depth + 2], c_ * 2, cout, 1, 1, 0)
    return {"c_": c_, "c1": c1, "c_skipped": cs,
            "seq": [init_bottleneck(keys[2 + d], c_, c_, 1) for d in range(depth)],
            "c_out": c_out,
            # K-split of c_out's weight (concat elimination): rows [0:c_) -> seq branch,
            # rows [c_:2c_) -> skipped branch (matches torch.cat order).
            "w_out_a": c_out["w2d"][:c_], "w_out_b": c_out["w2d"][c_:]}


def init_sppf(key, cin, cout):
    c_ = cin // 2
    k1, k2 = jax.random.split(key, 2)
    c1 = init_cbl(k1, cin, c_, 1, 1, 0)
    c_out = init_cbl(k2, c_ * 4, cout, 1, 1, 0)
    return {"c_": c_, "c1": c1, "c_out": c_out,
            "w_out_split": [c_out["w2d"][i * c_:(i + 1) * c_] for i in range(4)]}


def init_backbone(key, first_out=16):
    fo = first_out
    ks = jax.random.split(key, 10)
    return [
        ("cbl", init_cbl(ks[0], 3, fo, 6, 2, 2)),
        ("cbl", init_cbl(ks[1], fo, fo * 2, 3, 2, 1)),
        ("c3", init_c3(ks[2], fo * 2, fo * 2, 0.5, 2)),
        ("cbl", init_cbl(ks[3], fo * 2, fo * 4, 3, 2, 1)),
        ("c3", init_c3(ks[4], fo * 4, fo * 4, 0.5, 4)),
        ("cbl", init_cbl(ks[5], fo * 4, fo * 8, 3, 2, 1)),
        ("c3", init_c3(ks[6], fo * 8, fo * 8, 0.5, 6)),
        ("cbl", init_cbl(ks[7], fo * 8, fo * 16, 3, 2, 1)),
        ("c3", init_c3(ks[8], fo * 16, fo * 16, 0.5, 2)),
        ("sppf", init_sppf(ks[9], fo * 16, fo * 16)),
    ]


# --------------------------------------------------------------------------- forward
def cbl_fwd(x, p):
    n, h, w, cin = x.shape
    if p["k"] == 1 and p["stride"] == 1 and p["padding"] == 0:
        patches, oh, ow = x.reshape(n * h * w, cin), h, w          # 1x1: no im2col needed
    else:
        patches, oh, ow = _im2col(x, p["k"], p["k"], p["stride"], p["padding"])
    y = fused_conv([patches], [p["w2d"]], p["shift"], p["cout"])
    return y.reshape(n, oh, ow, p["cout"])


def bottleneck_fwd(bp, x):
    n, h, w, c = x.shape
    m = n * h * w
    h1 = cbl_fwd(x, bp["c1"])
    patches, _, _ = _im2col(h1, 3, 3, 1, 1)
    y = fused_conv([patches], [bp["c2"]["w2d"]], bp["c2"]["shift"], bp["c2"]["cout"],
                   residual=x.reshape(m, c))                       # skip add fused in-kernel
    return y.reshape(n, h, w, c)


def c3_fwd(p, x):
    n, h, w, cin = x.shape
    m = n * h * w
    c_ = p["c_"]
    # c1 + c_skipped fused: x is read once, both 1x1 CBLs computed in one kernel.
    a2d, b2d = dual_conv_1x1(x.reshape(m, cin),
                             p["c1"]["w2d"], p["c1"]["shift"],
                             p["c_skipped"]["w2d"], p["c_skipped"]["shift"])
    a = a2d.reshape(n, h, w, c_)
    for bp in p["seq"]:
        a = bottleneck_fwd(bp, a)
    # c_out without materializing the channel concat: K-split, two dots in one kernel.
    cout = p["c_out"]["cout"]
    y = fused_conv([a.reshape(m, c_), b2d],
                   [p["w_out_a"], p["w_out_b"]],
                   p["c_out"]["shift"], cout)
    return y.reshape(n, h, w, cout)


def sppf_fwd(p, x):
    x = cbl_fwd(x, p["c1"])
    p1, p2, p3 = sppf_pool_chain(x)                                # one kernel, 3 pools
    n, h, w, c_ = x.shape
    m = n * h * w
    branches = [t.reshape(m, c_) for t in (x, p1, p2, p3)]         # no concat materialized
    cout = p["c_out"]["cout"]
    y = fused_conv(branches, p["w_out_split"], p["c_out"]["shift"], cout)
    return y.reshape(n, h, w, cout)


def backbone_fwd(layers, x_nchw):
    assert x_nchw.shape[2] % 32 == 0 and x_nchw.shape[3] % 32 == 0, \
        "Width and Height aren't divisible by 32!"
    x = jnp.transpose(x_nchw, (0, 2, 3, 1)).astype(jnp.bfloat16)   # NCHW -> NHWC, bf16 acts
    backbone_connection = []
    for idx, (kind, p) in enumerate(layers):
        if kind == "cbl":
            x = cbl_fwd(x, p)
        elif kind == "c3":
            x = c3_fwd(p, x)
        else:  # "sppf"
            x = sppf_fwd(p, x)
        if idx in (4, 6):
            backbone_connection.append(
                jnp.transpose(x, (0, 3, 1, 2)).astype(jnp.float32))
    return jnp.transpose(x, (0, 3, 1, 2)).astype(jnp.float32), backbone_connection


# ------------------------------------------------------------------------------ main
if __name__ == "__main__":
    key = jax.random.PRNGKey(0)
    k_params, k_x = jax.random.split(key)

    FIRST_OUT = 16                                           # small width for the demo
    params = init_backbone(k_params, first_out=FIRST_OUT)

    # Input is NCHW (PyTorch convention): batch=2, channels=3, H=W=64 (divisible by 32).
    x = jax.random.normal(k_x, (2, 3, 64, 64), jnp.float32)

    out, conns = backbone_fwd(params, x)
    out = jax.block_until_ready(out)
    conns = [jax.block_until_ready(c) for c in conns]

    # sanity: shapes match the PyTorch module's outputs
    assert out.shape == (2, FIRST_OUT * 16, 2, 2)
    assert conns[0].shape == (2, FIRST_OUT * 4, 8, 8)
    assert conns[1].shape == (2, FIRST_OUT * 8, 4, 4)
    assert bool(jnp.all(jnp.isfinite(out)))
    assert all(bool(jnp.all(jnp.isfinite(c))) for c in conns)

    print("KERNEL_OK")
</pallas_src>

<mosaic_0001>
module attributes {stable_mosaic.version = 11 : i64} {
  func.func @kernel(%arg0: i32, %arg1: memref<512x108xbf16, #tpu.memory_space<vmem>>, %arg2: memref<108x16xbf16, #tpu.memory_space<vmem>>, %arg3: memref<1x16xf32, #tpu.memory_space<vmem>>, %arg4: memref<512x16xbf16, #tpu.memory_space<vmem>>) attributes {dimension_semantics = [#tpu.dimension_semantics<parallel>], iteration_bounds = array<i64: 4>, scalar_prefetch = 0 : i64, scratch_operands = 0 : i64, tpu.core_type = #tpu.core_type<tc>, window_params = [{transform_indices = @transform_0, window_bounds = array<i64: 512, 108>}, {pipeline_mode = #tpu.pipeline_mode<synchronous>, transform_indices = @transform_1, window_bounds = array<i64: 108, 16>}, {pipeline_mode = #tpu.pipeline_mode<synchronous>, transform_indices = @transform_2, window_bounds = array<i64: 1, 16>}, {transform_indices = @transform_3, window_bounds = array<i64: 512, 16>}]} {
    %c0 = arith.constant 0 : index
    %c0_0 = arith.constant 0 : index
    %0 = vector.load %arg1[%c0, %c0_0] : memref<512x108xbf16, #tpu.memory_space<vmem>>, vector<512x108xbf16>
    %c0_1 = arith.constant 0 : index
    %c0_2 = arith.constant 0 : index
    %1 = vector.load %arg2[%c0_1, %c0_2] : memref<108x16xbf16, #tpu.memory_space<vmem>>, vector<108x16xbf16>
    %cst = arith.constant dense<0.000000e+00> : vector<512x16xf32>
    %2 = tpu.matmul %0, %1, %cst {dimension_numbers = #tpu.dot_dimension_numbers<[1], [0], [0], [1], [0, 0, 1, 1], [], []>} : vector<512x108xbf16>, vector<108x16xbf16>, vector<512x16xf32> -> vector<512x16xf32>
    %c0_3 = arith.constant 0 : index
    %c0_4 = arith.constant 0 : index
    %3 = vector.load %arg3[%c0_3, %c0_4] : memref<1x16xf32, #tpu.memory_space<vmem>>, vector<1x16xf32>
    %4 = vector.broadcast %3 : vector<1x16xf32> to vector<512x16xf32>
    %5 = arith.addf %2, %4 : vector<512x16xf32>
    %6 = math.absf %5 : vector<512x16xf32>
    %cst_5 = arith.constant 0.000000e+00 : f32
    %7 = vector.broadcast %cst_5 : f32 to vector<512x16xf32>
    %8 = arith.subf %7, %6 : vector<512x16xf32>
    %9 = math.exp %8 : vector<512x16xf32>
    %cst_6 = arith.constant 1.000000e+00 : f32
    %10 = vector.broadcast %cst_6 : f32 to vector<512x16xf32>
    %11 = arith.addf %10, %9 : vector<512x16xf32>
    %12 = tpu.reciprocal %11 {approx = true} : vector<512x16xf32> -> vector<512x16xf32>
    %cst_7 = arith.constant 0.000000e+00 : f32
    %13 = vector.broadcast %cst_7 : f32 to vector<512x16xf32>
    %14 = arith.cmpf oge, %5, %13 : vector<512x16xf32>
    %15 = arith.mulf %9, %12 : vector<512x16xf32>
    %16 = arith.select %14, %12, %15 : vector<512x16xi1>, vector<512x16xf32>
    %17 = arith.mulf %5, %16 : vector<512x16xf32>
    %18 = arith.truncf %17 : vector<512x16xf32> to vector<512x16xbf16>
    %c0_8 = arith.constant 0 : index
    %c0_9 = arith.constant 0 : index
    %19 = vector.load %arg4[%c0_8, %c0_9] : memref<512x16xbf16, #tpu.memory_space<vmem>>, vector<512x16xbf16>
    tpu.vector_store %arg4[%c0_8, %c0_9], %18 {strides = array<i32>} : memref<512x16xbf16, #tpu.memory_space<vmem>>, vector<512x16xbf16>,
    return
  }
  func.func @transform_0(%arg0: i32) -> (i32, i32) {
    %c0_i32 = arith.constant 0 : i32
    %c0_i32_0 = arith.constant 0 : i32
    return %arg0, %c0_i32 : i32, i32
  }
  func.func @transform_1(%arg0: i32) -> (i32, i32) {
    %c0_i32 = arith.constant 0 : i32
    %c0_i32_0 = arith.constant 0 : i32
    %c0_i32_1 = arith.constant 0 : i32
    return %c0_i32, %c0_i32_0 : i32, i32
  }
  func.func @transform_2(%arg0: i32) -> (i32, i32) {
    %c0_i32 = arith.constant 0 : i32
    %c0_i32_0 = arith.constant 0 : i32
    %c0_i32_1 = arith.constant 0 : i32
    return %c0_i32, %c0_i32_0 : i32, i32
  }
  func.func @transform_3(%arg0: i32) -> (i32, i32) {
    %c0_i32 = arith.constant 0 : i32
    %c0_i32_0 = arith.constant 0 : i32
    return %arg0, %c0_i32 : i32, i32
  }
}

</mosaic_0001>

<llo_original>
// kernel: tpu_custom_call.1
$region0: #{tpu_custom_call.1}
  #allocation0 [shape = 'u32[]', space=smem, size = 0x4, offset = 0x4, fixed_abs, tag = 'smem constant byte address 0x4 - core index']
  #allocation1 [shape = 'u32[72,128]{1,0:T(1,128)}', space=vmem, size = 0x9000, scoped, tag = 'internal scratch']
  %s0 = inlined_call_operand.vmem [shape: bf16[2048,108], index: 0, kind: input, shape index: {}]
  %s1 = inlined_call_operand.vmem [shape: bf16[108,16], index: 1, kind: input, shape index: {}]
  %s2 = inlined_call_operand.vmem [shape: f32[1,16], index: 2, kind: input, shape index: {}]
  %s3 = inlined_call_operand.vmem [shape: bf16[2048,16], index: 3, kind: output, shape index: {}]
  %s4 = sld [smem:[#allocation0]]
  $region45: #{tpu_custom_call.1} parent=0
    _
  %s6 = ssub.s32 1, %s4
  %s7 = scalar_select 0, %s6, %s4
  loop: start=0, step=1, limit=6
  $region2: #{tpu_custom_call.1} parent=0 // loop_pre_header
    _
  $region3: #{tpu_custom_call.1} parent=0 // loop_header
    %s9 = sphi 0, %s13
    %p10 = scmp.ge.s32.totalorder %s9, 6
    %s19 = sphi 0, %s21
    %s22 = sphi 0, %s19
    %s23 = sphi 0, %s22
    %s39 = sphi 0, %s23
    %s43 = sphi 0, %s43
    %s45 = sphi 0, %s43
    %s46 = sphi 0, %s45
    %s60 = sphi 0, %s46
    %s64 = sphi 0, %s64
    %s66 = sphi 0, %s64
    %s67 = sphi 0, %s66
    %s81 = sphi 0, %s67
    %s87 = sphi 0, %s89
    %s90 = sphi 0, %s87
    %s91 = sphi 0, %s90
    %s107 = sphi 0, %s91
  $region4: #{tpu_custom_call.1} parent=0 // loop_header_branch
    %12 = sbr.rel (%p10) target = $region8
  $region5: #{tpu_custom_call.1} parent=0 // loop_body
    %s14 = ssub.s32 %s9, 1
    %s15 = ssub.s32 %s9, 2
    %s16 = sadd.s32 %s9, 1
    %s17 = ssub.s32 %s9, %s16
    %p18 = scmp.eq.s32.totalorder %s17, 0
    %s20 = sadd.s32 %s19, 1
    %s21 = scalar_select %p18, %s19, %s20
    %p24 = pneg %p18
    %p25 = scmp.eq.s32.totalorder %s9, 3
    %p26 = por %p24, %p25
    %p27 = scmp.ne.s32.totalorder %s19, %s22
    %p28 = scmp.eq.s32.totalorder %s9, 0
    %p29 = por %p27, %p28
    %p30 = scmp.ne.s32.totalorder %s19, %s22
    %p31 = scmp.eq.s32.totalorder %s14, 3
    %p32 = por %p30, %p31
    %p33 = scmp.ne.s32.totalorder %s22, %s23
    %p34 = scmp.eq.s32.totalorder %s14, 0
    %p35 = por %p33, %p34
    %p36 = scmp.ne.s32.totalorder %s22, %s23
    %p37 = scmp.eq.s32.totalorder %s15, 3
    %p38 = por %p36, %p37
    %p40 = scmp.ne.s32.totalorder %s23, %s39
    %p41 = scmp.eq.s32.totalorder %s15, 0
    %p42 = por %p40, %p41
    %s44 = sadd.s32 %s43, 1
    %p47 = scmp.eq.s32.totalorder %s9, 3
    %p48 = scmp.ne.s32.totalorder %s43, %s45
    %p49 = scmp.eq.s32.totalorder %s9, 0
    %p50 = por %p48, %p49
    %p51 = scmp.ne.s32.totalorder %s43, %s45
    %p52 = scmp.eq.s32.totalorder %s14, 3
    %p53 = por %p51, %p52
    %p54 = scmp.ne.s32.totalorder %s45, %s46
    %p55 = scmp.eq.s32.totalorder %s14, 0
    %p56 = por %p54, %p55
    %p57 = scmp.ne.s32.totalorder %s45, %s46
    %p58 = scmp.eq.s32.totalorder %s15, 3
    %p59 = por %p57, %p58
    %p61 = scmp.ne.s32.totalorder %s46, %s60
    %p62 = scmp.eq.s32.totalorder %s15, 0
    %p63 = por %p61, %p62
    %s65 = sadd.s32 %s64, 1
    %p68 = scmp.eq.s32.totalorder %s9, 3
    %p69 = scmp.ne.s32.totalorder %s64, %s66
    %p70 = scmp.eq.s32.totalorder %s9, 0
    %p71 = por %p69, %p70
    %p72 = scmp.ne.s32.totalorder %s64, %s66
    %p73 = scmp.eq.s32.totalorder %s14, 3
    %p74 = por %p72, %p73
    %p75 = scmp.ne.s32.totalorder %s66, %s67
    %p76 = scmp.eq.s32.totalorder %s14, 0
    %p77 = por %p75, %p76
    %p78 = scmp.ne.s32.totalorder %s66, %s67
    %p79 = scmp.eq.s32.totalorder %s15, 3
    %p80 = por %p78, %p79
    %p82 = scmp.ne.s32.totalorder %s67, %s81
    %p83 = scmp.eq.s32.totalorder %s15, 0
    %p84 = por %p82, %p83
    %s85 = ssub.s32 %s9, %s16
    %p86 = scmp.eq.s32.totalorder %s85, 0
    %s88 = sadd.s32 %s87, 1
    %s89 = scalar_select %p86, %s87, %s88
    %p92 = pneg %p86
    %p93 = scmp.eq.s32.totalorder %s9, 3
    %p94 = por %p92, %p93
    %p95 = scmp.ne.s32.totalorder %s87, %s90
    %p96 = scmp.eq.s32.totalorder %s9, 0
    %p97 = por %p95, %p96
    %p98 = scmp.ne.s32.totalorder %s87, %s90
    %p99 = scmp.eq.s32.totalorder %s14, 3
    %p100 = por %p98, %p99
    %p101 = scmp.ne.s32.totalorder %s90, %s91
    %p102 = scmp.eq.s32.totalorder %s14, 0
    %p103 = por %p101, %p102
    %p104 = scmp.ne.s32.totalorder %s90, %s91
    %p105 = scmp.eq.s32.totalorder %s15, 3
    %p106 = por %p104, %p105
    %p108 = scmp.ne.s32.totalorder %s91, %s107
    %p109 = scmp.eq.s32.totalorder %s15, 0
    %p110 = por %p108, %p109
    %p111 = scmp.le.s32.totalorder 1, %s9
    %p112 = scmp.lt.s32.totalorder %s9, 5
    %p113 = pnand %p111, %p112
    %p114 = pneg %p113
    // Predicated region
    $region9: #{tpu_custom_call.1} parent=5 // pred_check
      _
    $region10: #{tpu_custom_call.1} parent=5 // pred_check_branch
      %116 = sbr.rel (%p113) target = $region12
    $region11: #{tpu_custom_call.1} parent=5 // pred_region
      %s117 = ssub.s32 %s9, 1
      // Predicated region
      $region13: #{tpu_custom_call.1} parent=11 // pred_check
        %p118 = pneg %p56
      $region14: #{tpu_custom_call.1} parent=11 // pred_check_branch
        %120 = sbr.rel (%p118) target = $region16
      $region15: #{tpu_custom_call.1} parent=11 // pred_region
        _
      $region16: #{tpu_custom_call.1} parent=11 // pred_fallthru
        _
      // Predicated region
      $region17: #{tpu_custom_call.1} parent=11 // pred_check
        %p121 = pneg %p77
      $region18: #{tpu_custom_call.1} parent=11 // pred_check_branch
        %123 = sbr.rel (%p121) target = $region20
      $region19: #{tpu_custom_call.1} parent=11 // pred_region
        _
      $region20: #{tpu_custom_call.1} parent=11 // pred_fallthru
        _
    $region12: #{tpu_custom_call.1} parent=5 // pred_fallthru
      _
    %p124 = scmp.lt.s32.totalorder %s9, 4
    // Predicated region
    $region21: #{tpu_custom_call.1} parent=5 // pred_check
      %p125 = pneg %p124
    $region22: #{tpu_custom_call.1} parent=5 // pred_check_branch
      %127 = sbr.rel (%p125) target = $region24
    $region23: #{tpu_custom_call.1} parent=5 // pred_region
      // Predicated region
      $region25: #{tpu_custom_call.1} parent=23 // pred_check
        %p128 = pneg %p29
      $region26: #{tpu_custom_call.1} parent=23 // pred_check_branch
        %130 = sbr.rel (%p128) target = $region28
      $region27: #{tpu_custom_call.1} parent=23 // pred_region
        %s131 = smul.u32 64, %s9
        %p132 = scmp.lt.s32.totalorder %s131, 255
        %s133 = scalar_select %p132, %s131, 255
        %s134 = smul.addr %s133, 4
        %s135 = scalar_lea.vmem %s0, %s134
        %s136 = smul.u32 64, %s9
      $region28: #{tpu_custom_call.1} parent=23 // pred_fallthru
        _
    $region24: #{tpu_custom_call.1} parent=5 // pred_fallthru
      _
    %p137 = scmp.le.s32.totalorder 1, %s9
    %p138 = scmp.lt.s32.totalorder %s9, 5
    %p139 = pnand %p137, %p138
    %p140 = pneg %p139
    // Predicated region
    $region29: #{tpu_custom_call.1} parent=5 // pred_check
      _
    $region30: #{tpu_custom_call.1} parent=5 // pred_check_branch
      %142 = sbr.rel (%p139) target = $region32
    $region31: #{tpu_custom_call.1} parent=5 // pred_region
      %s143 = ssub.s32 %s9, 1
      %s144 = smul.u32 64, %s14
      %p145 = scmp.lt.s32.totalorder %s144, 255
      %s146 = scalar_select %p145, %s144, 255
      %s147 = smul.addr %s146, 4
      %s148 = scalar_lea.vmem %s0, %s147
      %p149 = pneg %p35
      %p150 = pneg %p32
      %p151 = pneg %p56
      %p152 = pneg %p53
      %p153 = pneg %p77
      %p154 = pneg %p74
      %p155 = pneg %p103
      %p156 = pneg %p100
      %s157 = smul.u32 64, %s14
      %p158 = scmp.lt.s32.totalorder %s157, 255
      %s159 = scalar_select %p158, %s157, 255
      %s160 = smul.addr %s159, 4
      %s161 = scalar_lea.vmem %s3, %s160
      %s162 = smul.u32 64, %s14
      %p163 = scmp.lt.s32.totalorder %s162, 255
      %s164 = scalar_select %p163, %s162, 255
      %s165 = smul.addr %s164, 4
      %s166 = scalar_lea.vmem %s0, %s165
      %s167 = smul.u32 64, %s14
      %s168 = smul.u32 64, %s14
      %p169 = scmp.lt.s32.totalorder %s168, 255
      %s170 = scalar_select %p169, %s168, 255
      %s171 = smul.addr %s170, 4
      %s172 = scalar_lea.vmem %s3, %s171
      %s173 = smul.u32 64, %s14
      %v175 = vld [vmem:[%s166] sm:$0xf]
      %v176 = vld [vmem:[%s166 + $0x4] sm:$0xf]
      %v177 = vld [vmem:[%s166 + $0x8] sm:$0xf]
      %v178 = vld [vmem:[%s166 + $0xc] sm:$0xf]
      %v179 = vld [vmem:[%s166 + $0x10] sm:$0xf]
      %v180 = vld [vmem:[%s166 + $0x14] sm:$0xf]
      %v181 = vld [vmem:[%s166 + $0x18] sm:$0xf]
      %v182 = vld [vmem:[%s166 + $0x1c] sm:$0xf]
      %v183 = vld [vmem:[%s166 + $0x20] sm:$0xf]
      %v184 = vld [vmem:[%s166 + $0x24] sm:$0xf]
      %v185 = vld [vmem:[%s166 + $0x28] sm:$0xf]
      %v186 = vld [vmem:[%s166 + $0x2c] sm:$0xf]
      %v187 = vld [vmem:[%s166 + $0x30] sm:$0xf]
      %v188 = vld [vmem:[%s166 + $0x34] sm:$0xf]
      %v189 = vld [vmem:[%s166 + $0x38] sm:$0xf]
      %v190 = vld [vmem:[%s166 + $0x3c] sm:$0xf]
      %v191 = vld [vmem:[%s166 + $0x40] sm:$0xf]
      %v192 = vld [vmem:[%s166 + $0x44] sm:$0xf]
      %v193 = vld [vmem:[%s166 + $0x48] sm:$0xf]
      %v194 = vld [vmem:[%s166 + $0x4c] sm:$0xf]
      %v195 = vld [vmem:[%s166 + $0x50] sm:$0xf]
      %v196 = vld [vmem:[%s166 + $0x54] sm:$0xf]
      %v197 = vld [vmem:[%s166 + $0x58] sm:$0xf]
      %v198 = vld [vmem:[%s166 + $0x5c] sm:$0xf]
      %v199 = vld [vmem:[%s166 + $0x60] sm:$0xf]
      %v200 = vld [vmem:[%s166 + $0x64] sm:$0xf]
      %v201 = vld [vmem:[%s166 + $0x68] sm:$0xf]
      %v202 = vld [vmem:[%s166 + $0x6c] sm:$0xf]
      %v203 = vld [vmem:[%s166 + $0x70] sm:$0xf]
      %v204 = vld [vmem:[%s166 + $0x74] sm:$0xf]
      %v205 = vld [vmem:[%s166 + $0x78] sm:$0xf]
      %v206 = vld [vmem:[%s166 + $0x7c] sm:$0xf]
      %v207 = vld [vmem:[%s166 + $0x80] sm:$0xf]
      %v208 = vld [vmem:[%s166 + $0x84] sm:$0xf]
      %v209 = vld [vmem:[%s166 + $0x88] sm:$0xf]
      %v210 = vld [vmem:[%s166 + $0x8c] sm:$0xf]
      %v211 = vld [vmem:[%s166 + $0x90] sm:$0xf]
      %v212 = vld [vmem:[%s166 + $0x94] sm:$0xf]
      %v213 = vld [vmem:[%s166 + $0x98] sm:$0xf]
      %v214 = vld [vmem:[%s166 + $0x9c] sm:$0xf]
      %v215 = vld [vmem:[%s166 + $0xa0] sm:$0xf]
      %v216 = vld [vmem:[%s166 + $0xa4] sm:$0xf]
      %v217 = vld [vmem:[%s166 + $0xa8] sm:$0xf]
      %v218 = vld [vmem:[%s166 + $0xac] sm:$0xf]
      %v219 = vld [vmem:[%s166 + $0xb0] sm:$0xf]
      %v220 = vld [vmem:[%s166 + $0xb4] sm:$0xf]
      %v221 = vld [vmem:[%s166 + $0xb8] sm:$0xf]
      %v222 = vld [vmem:[%s166 + $0xbc] sm:$0xf]
      %v223 = vld [vmem:[%s166 + $0xc0] sm:$0xf]
      %v224 = vld [vmem:[%s166 + $0xc4] sm:$0xf]
      %v225 = vld [vmem:[%s166 + $0xc8] sm:$0xf]
      %v226 = vld [vmem:[%s166 + $0xcc] sm:$0xf]
      %v227 = vld [vmem:[%s166 + $0xd0] sm:$0xf]
      %v228 = vld [vmem:[%s166 + $0xd4] sm:$0xf]
      %v229 = vld [vmem:[%s166 + $0xd8] sm:$0xf]
      %v230 = vld [vmem:[%s166 + $0xdc] sm:$0xf]
      %v231 = vld [vmem:[%s166 + $0xe0] sm:$0xf]
      %v232 = vld [vmem:[%s166 + $0xe4] sm:$0xf]
      %v233 = vld [vmem:[%s166 + $0xe8] sm:$0xf]
      %v234 = vld [vmem:[%s166 + $0xec] sm:$0xf]
      %v235 = vld [vmem:[%s166 + $0xf0] sm:$0xf]
      %v236 = vld [vmem:[%s166 + $0xf4] sm:$0xf]
      %v237 = vld [vmem:[%s166 + $0xf8] sm:$0xf]
      %v238 = vld [vmem:[%s166 + $0xfc] sm:$0xf]
      %v239 = vld [vmem:[%s1] sm:$0xf]
      %v240 = vld [vmem:[%s1 + $0x4] sm:$0xf]
      %v241 = vld [vmem:[%s1 + $0x8] sm:$0xf]
      %v242 = vld [vmem:[%s1 + $0xc] sm:$0xf]
      %v243 = vld [vmem:[%s1 + $0x10] sm:$0xf]
      %v244 = vld [vmem:[%s1 + $0x14] sm:$0xf]
      %v245 = vld [vmem:[%s1 + $0x18] sm:$0xf]
      %v246 = vld [vmem:[%s1 + $0x1c] sm:$0xf]
      %v247 = vld [vmem:[%s1 + $0x20] sm:$0xf]
      %v248 = vld [vmem:[%s1 + $0x24] sm:$0xf]
      %v249 = vld [vmem:[%s1 + $0x28] sm:$0xf]
      %v250 = vld [vmem:[%s1 + $0x2c] sm:$0xf]
      %v251 = vld [vmem:[%s1 + $0x30] sm:$0xf]
      %v252 = vld [vmem:[%s1 + $0x34] sm:$0x3]
      %v253 = vld [vmem:[%s2] sm:$0x1]
      %v255 = vperm.slane %v253, 0
      %v321 = vunpack.c.l.b16 %v175
      %v322 = vunpack.c.l.b16 %v176
      %v323 = vunpack.c.l.b16 %v177
      %v324 = vunpack.c.l.b16 %v178
      %v325 = vunpack.c.l.b16 %v179
      %v326 = vunpack.c.l.b16 %v180
      %v327 = vunpack.c.l.b16 %v181
      %v328 = vunpack.c.l.b16 %v182
      %v329 = vunpack.c.l.b16 %v183
      %v330 = vunpack.c.l.b16 %v184
      %v331 = vunpack.c.l.b16 %v185
      %v332 = vunpack.c.l.b16 %v186
      %v333 = vunpack.c.l.b16 %v187
      %v334 = vunpack.c.l.b16 %v188
      %v335 = vunpack.c.l.b16 %v189
      %v336 = vunpack.c.l.b16 %v190
      %v337 = vunpack.c.l.b16 %v191
      %v338 = vunpack.c.l.b16 %v192
      %v339 = vunpack.c.l.b16 %v193
      %v340 = vunpack.c.l.b16 %v194
      %v341 = vunpack.c.l.b16 %v195
      %v342 = vunpack.c.l.b16 %v196
      %v343 = vunpack.c.l.b16 %v197
      %v344 = vunpack.c.l.b16 %v198
      %v345 = vunpack.c.l.b16 %v199
      %v346 = vunpack.c.l.b16 %v200
      %v347 = vunpack.c.l.b16 %v201
      %v348 = vunpack.c.l.b16 %v202
      %v349 = vunpack.c.l.b16 %v203
      %v350 = vunpack.c.l.b16 %v204
      %v351 = vunpack.c.l.b16 %v205
      %v352 = vunpack.c.l.b16 %v206
      %v353 = vunpack.c.l.b16 %v207
      %v354 = vunpack.c.l.b16 %v208
      %v355 = vunpack.c.l.b16 %v209
      %v356 = vunpack.c.l.b16 %v210
      %v357 = vunpack.c.l.b16 %v211
      %v358 = vunpack.c.l.b16 %v212
      %v359 = vunpack.c.l.b16 %v213
      %v360 = vunpack.c.l.b16 %v214
      %v361 = vunpack.c.l.b16 %v215
      %v362 = vunpack.c.l.b16 %v216
      %v363 = vunpack.c.l.b16 %v217
      %v364 = vunpack.c.l.b16 %v218
      %v365 = vunpack.c.l.b16 %v219
      %v366 = vunpack.c.l.b16 %v220
      %v367 = vunpack.c.l.b16 %v221
      %v368 = vunpack.c.l.b16 %v222
      %v369 = vunpack.c.l.b16 %v223
      %v370 = vunpack.c.l.b16 %v224
      %v371 = vunpack.c.l.b16 %v225
      %v372 = vunpack.c.l.b16 %v226
      %v373 = vunpack.c.l.b16 %v227
      %v374 = vunpack.c.l.b16 %v228
      %v375 = vunpack.c.l.b16 %v229
      %v376 = vunpack.c.l.b16 %v230
      %v377 = vunpack.c.l.b16 %v231
      %v378 = vunpack.c.l.b16 %v232
      %v379 = vunpack.c.l.b16 %v233
      %v380 = vunpack.c.l.b16 %v234
      %v381 = vunpack.c.l.b16 %v235
      %v382 = vunpack.c.l.b16 %v236
      %v383 = vunpack.c.l.b16 %v237
      %v384 = vunpack.c.l.b16 %v238
      %v385 = vpack.c.b16 %v322, %v321
      %v386 = vpack.c.b16 %v324, %v323
      %v387 = vpack.c.b16 %v326, %v325
      %v388 = vpack.c.b16 %v328, %v327
      %v389 = vpack.c.b16 %v330, %v329
      %v390 = vpack.c.b16 %v332, %v331
      %v391 = vpack.c.b16 %v334, %v333
      %v392 = vpack.c.b16 %v336, %v335
      %v393 = vpack.c.b16 %v338, %v337
      %v394 = vpack.c.b16 %v340, %v339
      %v395 = vpack.c.b16 %v342, %v341
      %v396 = vpack.c.b16 %v344, %v343
      %v397 = vpack.c.b16 %v346, %v345
      %v398 = vpack.c.b16 %v348, %v347
      %v399 = vpack.c.b16 %v350, %v349
      %v400 = vpack.c.b16 %v352, %v351
      %v401 = vpack.c.b16 %v354, %v353
      %v402 = vpack.c.b16 %v356, %v355
      %v403 = vpack.c.b16 %v358, %v357
      %v404 = vpack.c.b16 %v360, %v359
      %v405 = vpack.c.b16 %v362, %v361
      %v406 = vpack.c.b16 %v364, %v363
      %v407 = vpack.c.b16 %v366, %v365
      %v408 = vpack.c.b16 %v368, %v367
      %v409 = vpack.c.b16 %v370, %v369
      %v410 = vpack.c.b16 %v372, %v371
      %v411 = vpack.c.b16 %v374, %v373
      %v412 = vpack.c.b16 %v376, %v375
      %v413 = vpack.c.b16 %v378, %v377
      %v414 = vpack.c.b16 %v380, %v379
      %v415 = vpack.c.b16 %v382, %v381
      %v416 = vpack.c.b16 %v384, %v383
      %v431 = vunpack.c.l.b16 %v239
      %v432 = vunpack.c.l.b16 %v240
      %v433 = vunpack.c.l.b16 %v241
      %v434 = vunpack.c.l.b16 %v242
      %v435 = vunpack.c.l.b16 %v243
      %v436 = vunpack.c.l.b16 %v244
      %v437 = vunpack.c.l.b16 %v245
      %v438 = vunpack.c.l.b16 %v246
      %v439 = vunpack.c.l.b16 %v247
      %v440 = vunpack.c.l.b16 %v248
      %v441 = vunpack.c.l.b16 %v249
      %v442 = vunpack.c.l.b16 %v250
      %v443 = vunpack.c.l.b16 %v251
      %v444 = vunpack.c.l.b16 %v252
      %v445 = vpack.c.b16 %v432, %v431
      %v446 = vpack.c.b16 %v434, %v433
      %v447 = vpack.c.b16 %v436, %v435
      %v448 = vpack.c.b16 %v438, %v437
      %v449 = vpack.c.b16 %v440, %v439
      %v450 = vpack.c.b16 %v442, %v441
      %v451 = vpack.c.b16 %v444, %v443
      %vm458 = vcmask 883712
      %v460 = vsel %vm458, %v385, 0
      %v463 = vsel %vm458, %v386, 0
      %v466 = vsel %vm458, %v387, 0
      %v469 = vsel %vm458, %v388, 0
      %v472 = vsel %vm458, %v389, 0
      %v475 = vsel %vm458, %v390, 0
      %v478 = vsel %vm458, %v391, 0
      %v481 = vsel %vm458, %v392, 0
      %v484 = vsel %vm458, %v393, 0
      %v487 = vsel %vm458, %v394, 0
      %v490 = vsel %vm458, %v395, 0
      %v493 = vsel %vm458, %v396, 0
      %v496 = vsel %vm458, %v397, 0
      %v499 = vsel %vm458, %v398, 0
      %v502 = vsel %vm458, %v399, 0
      %v505 = vsel %vm458, %v400, 0
      %v508 = vsel %vm458, %v401, 0
      %v511 = vsel %vm458, %v402, 0
      %v514 = vsel %vm458, %v403, 0
      %v517 = vsel %vm458, %v404, 0
      %v520 = vsel %vm458, %v405, 0
      %v523 = vsel %vm458, %v406, 0
      %v526 = vsel %vm458, %v407, 0
      %v529 = vsel %vm458, %v408, 0
      %v532 = vsel %vm458, %v409, 0
      %v535 = vsel %vm458, %v410, 0
      %v538 = vsel %vm458, %v411, 0
      %v541 = vsel %vm458, %v412, 0
      %v544 = vsel %vm458, %v413, 0
      %v547 = vsel %vm458, %v414, 0
      %v550 = vsel %vm458, %v415, 0
      %v553 = vsel %vm458, %v416, 0
      %vm555 = vcmask 1045504
      %v557 = vsel %vm555, %v451, 0
      %559 = vmatpush.bf16.msra.mxu0 0
      %560 = vmatpush.bf16.msra.mxu0 %v557
      %561 = vmatpush.bf16.msra.mxu0 %v450
      %562 = vmatpush.bf16.msra.mxu0 %v449
      %563 = vmatpush.bf16.msra.mxu0 %v448
      %564 = vmatpush.bf16.msra.mxu0 %v447
      %565 = vmatpush.bf16.msra.mxu0 %v446
      %566 = vmatpush.bf16.msra.mxu0 %v445
      %567 = vmatmul.bf16.gmra.mxu0 %v460
      %v568 = vpop.f32.mrf.mxu0
      %v569 = vadd.f32 %v255, %v568
      %v570 = vpop.f32.mrf.mxu0
      %v571 = vadd.f32 %v255, %v570
      %572 = vmatmul.bf16.gmra.mxu0 %v463
      %v573 = vpop.f32.mrf.mxu0
      %v574 = vadd.f32 %v255, %v573
      %v575 = vpop.f32.mrf.mxu0
      %v576 = vadd.f32 %v255, %v575
      %577 = vmatmul.bf16.gmra.mxu0 %v466
      %v578 = vpop.f32.mrf.mxu0
      %v579 = vadd.f32 %v255, %v578
      %v580 = vpop.f32.mrf.mxu0
      %v581 = vadd.f32 %v255, %v580
      %582 = vmatmul.bf16.gmra.mxu0 %v469
      %v583 = vpop.f32.mrf.mxu0
      %v584 = vadd.f32 %v255, %v583
      %v585 = vpop.f32.mrf.mxu0
      %v586 = vadd.f32 %v255, %v585
      %587 = vmatmul.bf16.gmra.mxu0 %v472
      %v588 = vpop.f32.mrf.mxu0
      %v589 = vadd.f32 %v255, %v588
      %v590 = vpop.f32.mrf.mxu0
      %v591 = vadd.f32 %v255, %v590
      %592 = vmatmul.bf16.gmra.mxu0 %v475
      %v593 = vpop.f32.mrf.mxu0
      %v594 = vadd.f32 %v255, %v593
      %v595 = vpop.f32.mrf.mxu0
      %v596 = vadd.f32 %v255, %v595
      %597 = vmatmul.bf16.gmra.mxu0 %v478
      %v598 = vpop.f32.mrf.mxu0
      %v599 = vadd.f32 %v255, %v598
      %v600 = vpop.f32.mrf.mxu0
      %v601 = vadd.f32 %v255, %v600
      %602 = vmatmul.bf16.gmra.mxu0 %v481
      %v603 = vpop.f32.mrf.mxu0
      %v604 = vadd.f32 %v255, %v603
      %v605 = vpop.f32.mrf.mxu0
      %v606 = vadd.f32 %v255, %v605
      %607 = vmatmul.bf16.gmra.mxu0 %v484
      %v608 = vpop.f32.mrf.mxu0
      %v609 = vadd.f32 %v255, %v608
      %v610 = vpop.f32.mrf.mxu0
      %v611 = vadd.f32 %v255, %v610
      %612 = vmatmul.bf16.gmra.mxu0 %v487
      %v613 = vpop.f32.mrf.mxu0
      %v614 = vadd.f32 %v255, %v613
      %v615 = vpop.f32.mrf.mxu0
      %v616 = vadd.f32 %v255, %v615
      %617 = vmatmul.bf16.gmra.mxu0 %v490
      %v618 = vpop.f32.mrf.mxu0
      %v619 = vadd.f32 %v255, %v618
      %v620 = vpop.f32.mrf.mxu0
      %v621 = vadd.f32 %v255, %v620
      %622 = vmatmul.bf16.gmra.mxu0 %v493
      %v623 = vpop.f32.mrf.mxu0
      %v624 = vadd.f32 %v255, %v623
      %v625 = vpop.f32.mrf.mxu0
      %v626 = vadd.f32 %v255, %v625
      %627 = vmatmul.bf16.gmra.mxu0 %v496
      %v628 = vpop.f32.mrf.mxu0
      %v629 = vadd.f32 %v255, %v628
      %v630 = vpop.f32.mrf.mxu0
      %v631 = vadd.f32 %v255, %v630
      %632 = vmatmul.bf16.gmra.mxu0 %v499
      %v633 = vpop.f32.mrf.mxu0
      %v634 = vadd.f32 %v255, %v633
      %v635 = vpop.f32.mrf.mxu0
      %v636 = vadd.f32 %v255, %v635
      %637 = vmatmul.bf16.gmra.mxu0 %v502
      %v638 = vpop.f32.mrf.mxu0
      %v639 = vadd.f32 %v255, %v638
      %v640 = vpop.f32.mrf.mxu0
      %v641 = vadd.f32 %v255, %v640
      %642 = vmatmul.bf16.gmra.mxu0 %v505
      %v643 = vpop.f32.mrf.mxu0
      %v644 = vadd.f32 %v255, %v643
      %v645 = vpop.f32.mrf.mxu0
      %v646 = vadd.f32 %v255, %v645
      %647 = vmatmul.bf16.gmra.mxu0 %v508
      %v648 = vpop.f32.mrf.mxu0
      %v649 = vadd.f32 %v255, %v648
      %v650 = vpop.f32.mrf.mxu0
      %v651 = vadd.f32 %v255, %v650
      %652 = vmatmul.bf16.gmra.mxu0 %v511
      %v653 = vpop.f32.mrf.mxu0
      %v654 = vadd.f32 %v255, %v653
      %v655 = vpop.f32.mrf.mxu0
      %v656 = vadd.f32 %v255, %v655
      %657 = vmatmul.bf16.gmra.mxu0 %v514
      %v658 = vpop.f32.mrf.mxu0
      %v659 = vadd.f32 %v255, %v658
      %v660 = vpop.f32.mrf.mxu0
      %v661 = vadd.f32 %v255, %v660
      %662 = vmatmul.bf16.gmra.mxu0 %v517
      %v663 = vpop.f32.mrf.mxu0
      %v664 = vadd.f32 %v255, %v663
      %v665 = vpop.f32.mrf.mxu0
      %v666 = vadd.f32 %v255, %v665
      %667 = vmatmul.bf16.gmra.mxu0 %v520
      %v668 = vpop.f32.mrf.mxu0
      %v669 = vadd.f32 %v255, %v668
      %v670 = vpop.f32.mrf.mxu0
      %v671 = vadd.f32 %v255, %v670
      %672 = vmatmul.bf16.gmra.mxu0 %v523
      %v673 = vpop.f32.mrf.mxu0
      %v674 = vadd.f32 %v255, %v673
      %v675 = vpop.f32.mrf.mxu0
      %v676 = vadd.f32 %v255, %v675
      %677 = vmatmul.bf16.gmra.mxu0 %v526
      %v678 = vpop.f32.mrf.mxu0
      %v679 = vadd.f32 %v255, %v678
      %v680 = vpop.f32.mrf.mxu0
      %v681 = vadd.f32 %v255, %v680
      %682 = vmatmul.bf16.gmra.mxu0 %v529
      %v683 = vpop.f32.mrf.mxu0
      %v684 = vadd.f32 %v255, %v683
      %v685 = vpop.f32.mrf.mxu0
      %v686 = vadd.f32 %v255, %v685
      %687 = vmatmul.bf16.gmra.mxu0 %v532
      %v688 = vpop.f32.mrf.mxu0
      %v689 = vadd.f32 %v255, %v688
      %v690 = vpop.f32.mrf.mxu0
      %v691 = vadd.f32 %v255, %v690
      %692 = vmatmul.bf16.gmra.mxu0 %v535
      %v693 = vpop.f32.mrf.mxu0
      %v694 = vadd.f32 %v255, %v693
      %v695 = vpop.f32.mrf.mxu0
      %v696 = vadd.f32 %v255, %v695
      %697 = vmatmul.bf16.gmra.mxu0 %v538
      %v698 = vpop.f32.mrf.mxu0
      %v699 = vadd.f32 %v255, %v698
      %v700 = vpop.f32.mrf.mxu0
      %v701 = vadd.f32 %v255, %v700
      %702 = vmatmul.bf16.gmra.mxu0 %v541
      %v703 = vpop.f32.mrf.mxu0
      %v704 = vadd.f32 %v255, %v703
      %v705 = vpop.f32.mrf.mxu0
      %v706 = vadd.f32 %v255, %v705
      %707 = vmatmul.bf16.gmra.mxu0 %v544
      %v708 = vpop.f32.mrf.mxu0
      %v709 = vadd.f32 %v255, %v708
      %v710 = vpop.f32.mrf.mxu0
      %v711 = vadd.f32 %v255, %v710
      %712 = vmatmul.bf16.gmra.mxu0 %v547
      %v713 = vpop.f32.mrf.mxu0
      %v714 = vadd.f32 %v255, %v713
      %v715 = vpop.f32.mrf.mxu0
      %v716 = vadd.f32 %v255, %v715
      %717 = vmatmul.bf16.gmra.mxu0 %v550
      %v718 = vpop.f32.mrf.mxu0
      %v719 = vadd.f32 %v255, %v718
      %v720 = vpop.f32.mrf.mxu0
      %v721 = vadd.f32 %v255, %v720
      %722 = vmatmul.bf16.gmra.mxu0 %v553
      %v723 = vpop.f32.mrf.mxu0
      %v724 = vadd.f32 %v255, %v723
      %v725 = vpop.f32.mrf.mxu0
      %v726 = vadd.f32 %v255, %v725
      %727 = vdwg.mxu0
      %v728 = vand.u32 2147483647, %v569
      %v729 = vand.u32 2147483647, %v571
      %v730 = vand.u32 2147483647, %v574
      %v731 = vand.u32 2147483647, %v576
      %v732 = vand.u32 2147483647, %v579
      %v733 = vand.u32 2147483647, %v581
      %v734 = vand.u32 2147483647, %v584
      %v735 = vand.u32 2147483647, %v586
      %v736 = vand.u32 2147483647, %v589
      %v737 = vand.u32 2147483647, %v591
      %v738 = vand.u32 2147483647, %v594
      %v739 = vand.u32 2147483647, %v596
      %v740 = vand.u32 2147483647, %v599
      %v741 = vand.u32 2147483647, %v601
      %v742 = vand.u32 2147483647, %v604
      %v743 = vand.u32 2147483647, %v606
      %v744 = vand.u32 2147483647, %v609
      %v745 = vand.u32 2147483647, %v611
      %v746 = vand.u32 2147483647, %v614
      %v747 = vand.u32 2147483647, %v616
      %v748 = vand.u32 2147483647, %v619
      %v749 = vand.u32 2147483647, %v621
      %v750 = vand.u32 2147483647, %v624
      %v751 = vand.u32 2147483647, %v626
      %v752 = vand.u32 2147483647, %v629
      %v753 = vand.u32 2147483647, %v631
      %v754 = vand.u32 2147483647, %v634
      %v755 = vand.u32 2147483647, %v636
      %v756 = vand.u32 2147483647, %v639
      %v757 = vand.u32 2147483647, %v641
      %v758 = vand.u32 2147483647, %v644
      %v759 = vand.u32 2147483647, %v646
      %v760 = vand.u32 2147483647, %v649
      %v761 = vand.u32 2147483647, %v651
      %v762 = vand.u32 2147483647, %v654
      %v763 = vand.u32 2147483647, %v656
      %v764 = vand.u32 2147483647, %v659
      %v765 = vand.u32 2147483647, %v661
      %v766 = vand.u32 2147483647, %v664
      %v767 = vand.u32 2147483647, %v666
      %v768 = vand.u32 2147483647, %v669
      %v769 = vand.u32 2147483647, %v671
      %v770 = vand.u32 2147483647, %v674
      %v771 = vand.u32 2147483647, %v676
      %v772 = vand.u32 2147483647, %v679
      %v773 = vand.u32 2147483647, %v681
      %v774 = vand.u32 2147483647, %v684
      %v775 = vand.u32 2147483647, %v686
      %v776 = vand.u32 2147483647, %v689
      %v777 = vand.u32 2147483647, %v691
      %v778 = vand.u32 2147483647, %v694
      %v779 = vand.u32 2147483647, %v696
      %v780 = vand.u32 2147483647, %v699
      %v781 = vand.u32 2147483647, %v701
      %v782 = vand.u32 2147483647, %v704
      %v783 = vand.u32 2147483647, %v706
      %v784 = vand.u32 2147483647, %v709
      %v785 = vand.u32 2147483647, %v711
      %v786 = vand.u32 2147483647, %v714
      %v787 = vand.u32 2147483647, %v716
      %v788 = vand.u32 2147483647, %v719
      %v789 = vand.u32 2147483647, %v721
      %v790 = vand.u32 2147483647, %v724
      %v791 = vand.u32 2147483647, %v726
      %v792 = vsub.f32 0.0, %v728
      %v793 = vsub.f32 0.0, %v729
      %v794 = vsub.f32 0.0, %v730
      %v795 = vsub.f32 0.0, %v731
      %v796 = vsub.f32 0.0, %v732
      %v797 = vsub.f32 0.0, %v733
      %v798 = vsub.f32 0.0, %v734
      %v799 = vsub.f32 0.0, %v735
      %v800 = vsub.f32 0.0, %v736
      %v801 = vsub.f32 0.0, %v737
      %v802 = vsub.f32 0.0, %v738
      %v803 = vsub.f32 0.0, %v739
      %v804 = vsub.f32 0.0, %v740
      %v805 = vsub.f32 0.0, %v741
      %v806 = vsub.f32 0.0, %v742
      %v807 = vsub.f32 0.0, %v743
      %v808 = vsub.f32 0.0, %v744
      %v809 = vsub.f32 0.0, %v745
      %v810 = vsub.f32 0.0, %v746
      %v811 = vsub.f32 0.0, %v747
      %v812 = vsub.f32 0.0, %v748
      %v813 = vsub.f32 0.0, %v749
      %v814 = vsub.f32 0.0, %v750
      %v815 = vsub.f32 0.0, %v751
      %v816 = vsub.f32 0.0, %v752
      %v817 = vsub.f32 0.0, %v753
      %v818 = vsub.f32 0.0, %v754
      %v819 = vsub.f32 0.0, %v755
      %v820 = vsub.f32 0.0, %v756
      %v821 = vsub.f32 0.0, %v757
      %v822 = vsub.f32 0.0, %v758
      %v823 = vsub.f32 0.0, %v759
      %v824 = vsub.f32 0.0, %v760
      %v825 = vsub.f32 0.0, %v761
      %v826 = vsub.f32 0.0, %v762
      %v827 = vsub.f32 0.0, %v763
      %v828 = vsub.f32 0.0, %v764
      %v829 = vsub.f32 0.0, %v765
      %v830 = vsub.f32 0.0, %v766
      %v831 = vsub.f32 0.0, %v767
      %v832 = vsub.f32 0.0, %v768
      %v833 = vsub.f32 0.0, %v769
      %v834 = vsub.f32 0.0, %v770
      %v835 = vsub.f32 0.0, %v771
      %v836 = vsub.f32 0.0, %v772
      %v837 = vsub.f32 0.0, %v773
      %v838 = vsub.f32 0.0, %v774
      %v839 = vsub.f32 0.0, %v775
      %v840 = vsub.f32 0.0, %v776
      %v841 = vsub.f32 0.0, %v777
      %v842 = vsub.f32 0.0, %v778
      %v843 = vsub.f32 0.0, %v779
      %v844 = vsub.f32 0.0, %v780
      %v845 = vsub.f32 0.0, %v781
      %v846 = vsub.f32 0.0, %v782
      %v847 = vsub.f32 0.0, %v783
      %v848 = vsub.f32 0.0, %v784
      %v849 = vsub.f32 0.0, %v785
      %v850 = vsub.f32 0.0, %v786
      %v851 = vsub.f32 0.0, %v787
      %v852 = vsub.f32 0.0, %v788
      %v853 = vsub.f32 0.0, %v789
      %v854 = vsub.f32 0.0, %v790
      %v855 = vsub.f32 0.0, %v791
      %v856 = vmul.f32 %v792, 1.442695
      %v857 = vpow.pop %v856
      %v858 = vmul.f32 %v793, 1.442695
      %v859 = vpow.pop %v858
      %v860 = vmul.f32 %v794, 1.442695
      %v861 = vpow.pop %v860
      %v862 = vmul.f32 %v795, 1.442695
      %v863 = vpow.pop %v862
      %v864 = vmul.f32 %v796, 1.442695
      %v865 = vpow.pop %v864
      %v866 = vmul.f32 %v797, 1.442695
      %v867 = vpow.pop %v866
      %v868 = vmul.f32 %v798, 1.442695
      %v869 = vpow.pop %v868
      %v870 = vmul.f32 %v799, 1.442695
      %v871 = vpow.pop %v870
      %v872 = vmul.f32 %v800, 1.442695
      %v873 = vpow.pop %v872
      %v874 = vmul.f32 %v801, 1.442695
      %v875 = vpow.pop %v874
      %v876 = vmul.f32 %v802, 1.442695
      %v877 = vpow.pop %v876
      %v878 = vmul.f32 %v803, 1.442695
      %v879 = vpow.pop %v878
      %v880 = vmul.f32 %v804, 1.442695
      %v881 = vpow.pop %v880
      %v882 = vmul.f32 %v805, 1.442695
      %v883 = vpow.pop %v882
      %v884 = vmul.f32 %v806, 1.442695
      %v885 = vpow.pop %v884
      %v886 = vmul.f32 %v807, 1.442695
      %v887 = vpow.pop %v886
      %v888 = vmul.f32 %v808, 1.442695
      %v889 = vpow.pop %v888
      %v890 = vmul.f32 %v809, 1.442695
      %v891 = vpow.pop %v890
      %v892 = vmul.f32 %v810, 1.442695
      %v893 = vpow.pop %v892
      %v894 = vmul.f32 %v811, 1.442695
      %v895 = vpow.pop %v894
      %v896 = vmul.f32 %v812, 1.442695
      %v897 = vpow.pop %v896
      %v898 = vmul.f32 %v813, 1.442695
      %v899 = vpow.pop %v898
      %v900 = vmul.f32 %v814, 1.442695
      %v901 = vpow.pop %v900
      %v902 = vmul.f32 %v815, 1.442695
      %v903 = vpow.pop %v902
      %v904 = vmul.f32 %v816, 1.442695
      %v905 = vpow.pop %v904
      %v906 = vmul.f32 %v817, 1.442695
      %v907 = vpow.pop %v906
      %v908 = vmul.f32 %v818, 1.442695
      %v909 = vpow.pop %v908
      %v910 = vmul.f32 %v819, 1.442695
      %v911 = vpow.pop %v910
      %v912 = vmul.f32 %v820, 1.442695
      %v913 = vpow.pop %v912
      %v914 = vmul.f32 %v821, 1.442695
      %v915 = vpow.pop %v914
      %v916 = vmul.f32 %v822, 1.442695
      %v917 = vpow.pop %v916
      %v918 = vmul.f32 %v823, 1.442695
      %v919 = vpow.pop %v918
      %v920 = vmul.f32 %v824, 1.442695
      %v921 = vpow.pop %v920
      %v922 = vmul.f32 %v825, 1.442695
      %v923 = vpow.pop %v922
      %v924 = vmul.f32 %v826, 1.442695
      %v925 = vpow.pop %v924
      %v926 = vmul.f32 %v827, 1.442695
      %v927 = vpow.pop %v926
      %v928 = vmul.f32 %v828, 1.442695
      %v929 = vpow.pop %v928
      %v930 = vmul.f32 %v829, 1.442695
      %v931 = vpow.pop %v930
      %v932 = vmul.f32 %v830, 1.442695
      %v933 = vpow.pop %v932
      %v934 = vmul.f32 %v831, 1.442695
      %v935 = vpow.pop %v934
      %v936 = vmul.f32 %v832, 1.442695
      %v937 = vpow.pop %v936
      %v938 = vmul.f32 %v833, 1.442695
      %v939 = vpow.pop %v938
      %v940 = vmul.f32 %v834, 1.442695
      %v941 = vpow.pop %v940
      %v942 = vmul.f32 %v835, 1.442695
      %v943 = vpow.pop %v942
      %v944 = vmul.f32 %v836, 1.442695
      %v945 = vpow.pop %v944
      %v946 = vmul.f32 %v837, 1.442695
      %v947 = vpow.pop %v946
      %v948 = vmul.f32 %v838, 1.442695
      %v949 = vpow.pop %v948
      %v950 = vmul.f32 %v839, 1.442695
      %v951 = vpow.pop %v950
      %v952 = vmul.f32 %v840, 1.442695
      %v953 = vpow.pop %v952
      %v954 = vmul.f32 %v841, 1.442695
      %v955 = vpow.pop %v954
      %v956 = vmul.f32 %v842, 1.442695
      %v957 = vpow.pop %v956
      %v958 = vmul.f32 %v843, 1.442695
      %v959 = vpow.pop %v958
      %v960 = vmul.f32 %v844, 1.442695
      %v961 = vpow.pop %v960
      %v962 = vmul.f32 %v845, 1.442695
      %v963 = vpow.pop %v962
      %v964 = vmul.f32 %v846, 1.442695
      %v965 = vpow.pop %v964
      %v966 = vmul.f32 %v847, 1.442695
      %v967 = vpow.pop %v966
      %v968 = vmul.f32 %v848, 1.442695
      %v969 = vpow.pop %v968
      %v970 = vmul.f32 %v849, 1.442695
      %v971 = vpow.pop %v970
      %v972 = vmul.f32 %v850, 1.442695
      %v973 = vpow.pop %v972
      %v974 = vmul.f32 %v851, 1.442695
      %v975 = vpow.pop %v974
      %v976 = vmul.f32 %v852, 1.442695
      %v977 = vpow.pop %v976
      %v978 = vmul.f32 %v853, 1.442695
      %v979 = vpow.pop %v978
      %v980 = vmul.f32 %v854, 1.442695
      %v981 = vpow.pop %v980
      %v982 = vmul.f32 %v855, 1.442695
      %v983 = vpow.pop %v982
      %v984 = vadd.f32 %v857, 1.0
      %v985 = vadd.f32 %v859, 1.0
      %v986 = vadd.f32 %v861, 1.0
      %v987 = vadd.f32 %v863, 1.0
      %v988 = vadd.f32 %v865, 1.0
      %v989 = vadd.f32 %v867, 1.0
      %v990 = vadd.f32 %v869, 1.0
      %v991 = vadd.f32 %v871, 1.0
      %v992 = vadd.f32 %v873, 1.0
      %v993 = vadd.f32 %v875, 1.0
      %v994 = vadd.f32 %v877, 1.0
      %v995 = vadd.f32 %v879, 1.0
      %v996 = vadd.f32 %v881, 1.0
      %v997 = vadd.f32 %v883, 1.0
      %v998 = vadd.f32 %v885, 1.0
      %v999 = vadd.f32 %v887, 1.0
      %v1000 = vadd.f32 %v889, 1.0
      %v1001 = vadd.f32 %v891, 1.0
      %v1002 = vadd.f32 %v893, 1.0
      %v1003 = vadd.f32 %v895, 1.0
      %v1004 = vadd.f32 %v897, 1.0
      %v1005 = vadd.f32 %v899, 1.0
      %v1006 = vadd.f32 %v901, 1.0
      %v1007 = vadd.f32 %v903, 1.0
      %v1008 = vadd.f32 %v905, 1.0
      %v1009 = vadd.f32 %v907, 1.0
      %v1010 = vadd.f32 %v909, 1.0
      %v1011 = vadd.f32 %v911, 1.0
      %v1012 = vadd.f32 %v913, 1.0
      %v1013 = vadd.f32 %v915, 1.0
      %v1014 = vadd.f32 %v917, 1.0
      %v1015 = vadd.f32 %v919, 1.0
      %v1016 = vadd.f32 %v921, 1.0
      %v1017 = vadd.f32 %v923, 1.0
      %v1018 = vadd.f32 %v925, 1.0
      %v1019 = vadd.f32 %v927, 1.0
      %v1020 = vadd.f32 %v929, 1.0
      %v1021 = vadd.f32 %v931, 1.0
      %v1022 = vadd.f32 %v933, 1.0
      %v1023 = vadd.f32 %v935, 1.0
      %v1024 = vadd.f32 %v937, 1.0
      %v1025 = vadd.f32 %v939, 1.0
      %v1026 = vadd.f32 %v941, 1.0
      %v1027 = vadd.f32 %v943, 1.0
      %v1028 = vadd.f32 %v945, 1.0
      %v1029 = vadd.f32 %v947, 1.0
      %v1030 = vadd.f32 %v949, 1.0
      %v1031 = vadd.f32 %v951, 1.0
      %v1032 = vadd.f32 %v953, 1.0
      %v1033 = vadd.f32 %v955, 1.0
      %v1034 = vadd.f32 %v957, 1.0
      %v1035 = vadd.f32 %v959, 1.0
      %v1036 = vadd.f32 %v961, 1.0
      %v1037 = vadd.f32 %v963, 1.0
      %v1038 = vadd.f32 %v965, 1.0
      %v1039 = vadd.f32 %v967, 1.0
      %v1040 = vadd.f32 %v969, 1.0
      %v1041 = vadd.f32 %v971, 1.0
      %v1042 = vadd.f32 %v973, 1.0
      %v1043 = vadd.f32 %v975, 1.0
      %v1044 = vadd.f32 %v977, 1.0
      %v1045 = vadd.f32 %v979, 1.0
      %v1046 = vadd.f32 %v981, 1.0
      %v1047 = vadd.f32 %v983, 1.0
      %v1048 = vrcp.pop %v984
      %v1049 = vrcp.pop %v985
      %v1050 = vrcp.pop %v986
      %v1051 = vrcp.pop %v987
      %v1052 = vrcp.pop %v988
      %v1053 = vrcp.pop %v989
      %v1054 = vrcp.pop %v990
      %v1055 = vrcp.pop %v991
      %v1056 = vrcp.pop %v992
      %v1057 = vrcp.pop %v993
      %v1058 = vrcp.pop %v994
      %v1059 = vrcp.pop %v995
      %v1060 = vrcp.pop %v996
      %v1061 = vrcp.pop %v997
      %v1062 = vrcp.pop %v998
      %v1063 = vrcp.pop %v999
      %v1064 = vrcp.pop %v1000
      %v1065 = vrcp.pop %v1001
      %v1066 = vrcp.pop %v1002
      %v1067 = vrcp.pop %v1003
      %v1068 = vrcp.pop %v1004
      %v1069 = vrcp.pop %v1005
      %v1070 = vrcp.pop %v1006
      %v1071 = vrcp.pop %v1007
      %v1072 = vrcp.pop %v1008
      %v1073 = vrcp.pop %v1009
      %v1074 = vrcp.pop %v1010
      %v1075 = vrcp.pop %v1011
      %v1076 = vrcp.pop %v1012
      %v1077 = vrcp.pop %v1013
      %v1078 = vrcp.pop %v1014
      %v1079 = vrcp.pop %v1015
      %v1080 = vrcp.pop %v1016
      %v1081 = vrcp.pop %v1017
      %v1082 = vrcp.pop %v1018
      %v1083 = vrcp.pop %v1019
      %v1084 = vrcp.pop %v1020
      %v1085 = vrcp.pop %v1021
      %v1086 = vrcp.pop %v1022
      %v1087 = vrcp.pop %v1023
      %v1088 = vrcp.pop %v1024
      %v1089 = vrcp.pop %v1025
      %v1090 = vrcp.pop %v1026
      %v1091 = vrcp.pop %v1027
      %v1092 = vrcp.pop %v1028
      %v1093 = vrcp.pop %v1029
      %v1094 = vrcp.pop %v1030
      %v1095 = vrcp.pop %v1031
      %v1096 = vrcp.pop %v1032
      %v1097 = vrcp.pop %v1033
      %v1098 = vrcp.pop %v1034
      %v1099 = vrcp.pop %v1035
      %v1100 = vrcp.pop %v1036
      %v1101 = vrcp.pop %v1037
      %v1102 = vrcp.pop %v1038
      %v1103 = vrcp.pop %v1039
      %v1104 = vrcp.pop %v1040
      %v1105 = vrcp.pop %v1041
      %v1106 = vrcp.pop %v1042
      %v1107 = vrcp.pop %v1043
      %v1108 = vrcp.pop %v1044
      %v1109 = vrcp.pop %v1045
      %v1110 = vrcp.pop %v1046
      %v1111 = vrcp.pop %v1047
      %vm1112 = vcmp.ge.f32.partialorder %v569, 0.0
      %vm1113 = vcmp.ge.f32.partialorder %v571, 0.0
      %vm1114 = vcmp.ge.f32.partialorder %v574, 0.0
      %vm1115 = vcmp.ge.f32.partialorder %v576, 0.0
      %vm1116 = vcmp.ge.f32.partialorder %v579, 0.0
      %vm1117 = vcmp.ge.f32.partialorder %v581, 0.0
      %vm1118 = vcmp.ge.f32.partialorder %v584, 0.0
      %vm1119 = vcmp.ge.f32.partialorder %v586, 0.0
      %vm1120 = vcmp.ge.f32.partialorder %v589, 0.0
      %vm1121 = vcmp.ge.f32.partialorder %v591, 0.0
      %vm1122 = vcmp.ge.f32.partialorder %v594, 0.0
      %vm1123 = vcmp.ge.f32.partialorder %v596, 0.0
      %vm1124 = vcmp.ge.f32.partialorder %v599, 0.0
      %vm1125 = vcmp.ge.f32.partialorder %v601, 0.0
      %vm1126 = vcmp.ge.f32.partialorder %v604, 0.0
      %vm1127 = vcmp.ge.f32.partialorder %v606, 0.0
      %vm1128 = vcmp.ge.f32.partialorder %v609, 0.0
      %vm1129 = vcmp.ge.f32.partialorder %v611, 0.0
      %vm1130 = vcmp.ge.f32.partialorder %v614, 0.0
      %vm1131 = vcmp.ge.f32.partialorder %v616, 0.0
      %vm1132 = vcmp.ge.f32.partialorder %v619, 0.0
      %vm1133 = vcmp.ge.f32.partialorder %v621, 0.0
      %vm1134 = vcmp.ge.f32.partialorder %v624, 0.0
      %vm1135 = vcmp.ge.f32.partialorder %v626, 0.0
      %vm1136 = vcmp.ge.f32.partialorder %v629, 0.0
      %vm1137 = vcmp.ge.f32.partialorder %v631, 0.0
      %vm1138 = vcmp.ge.f32.partialorder %v634, 0.0
      %vm1139 = vcmp.ge.f32.partialorder %v636, 0.0
      %vm1140 = vcmp.ge.f32.partialorder %v639, 0.0
      %vm1141 = vcmp.ge.f32.partialorder %v641, 0.0
      %vm1142 = vcmp.ge.f32.partialorder %v644, 0.0
      %vm1143 = vcmp.ge.f32.partialorder %v646, 0.0
      %vm1144 = vcmp.ge.f32.partialorder %v649, 0.0
      %vm1145 = vcmp.ge.f32.partialorder %v651, 0.0
      %vm1146 = vcmp.ge.f32.partialorder %v654, 0.0
      %vm1147 = vcmp.ge.f32.partialorder %v656, 0.0
      %vm1148 = vcmp.ge.f32.partialorder %v659, 0.0
      %vm1149 = vcmp.ge.f32.partialorder %v661, 0.0
      %vm1150 = vcmp.ge.f32.partialorder %v664, 0.0
      %vm1151 = vcmp.ge.f32.partialorder %v666, 0.0
      %vm1152 = vcmp.ge.f32.partialorder %v669, 0.0
      %vm1153 = vcmp.ge.f32.partialorder %v671, 0.0
      %vm1154 = vcmp.ge.f32.partialorder %v674, 0.0
      %vm1155 = vcmp.ge.f32.partialorder %v676, 0.0
      %vm1156 = vcmp.ge.f32.partialorder %v679, 0.0
      %vm1157 = vcmp.ge.f32.partialorder %v681, 0.0
      %vm1158 = vcmp.ge.f32.partialorder %v684, 0.0
      %vm1159 = vcmp.ge.f32.partialorder %v686, 0.0
      %vm1160 = vcmp.ge.f32.partialorder %v689, 0.0
      %vm1161 = vcmp.ge.f32.partialorder %v691, 0.0
      %vm1162 = vcmp.ge.f32.partialorder %v694, 0.0
      %vm1163 = vcmp.ge.f32.partialorder %v696, 0.0
      %vm1164 = vcmp.ge.f32.partialorder %v699, 0.0
      %vm1165 = vcmp.ge.f32.partialorder %v701, 0.0
      %vm1166 = vcmp.ge.f32.partialorder %v704, 0.0
      %vm1167 = vcmp.ge.f32.partialorder %v706, 0.0
      %vm1168 = vcmp.ge.f32.partialorder %v709, 0.0
      %vm1169 = vcmp.ge.f32.partialorder %v711, 0.0
      %vm1170 = vcmp.ge.f32.partialorder %v714, 0.0
      %vm1171 = vcmp.ge.f32.partialorder %v716, 0.0
      %vm1172 = vcmp.ge.f32.partialorder %v719, 0.0
      %vm1173 = vcmp.ge.f32.partialorder %v721, 0.0
      %vm1174 = vcmp.ge.f32.partialorder %v724, 0.0
      %vm1175 = vcmp.ge.f32.partialorder %v726, 0.0
      %v1176 = vmul.f32 %v857, %v1048
      %v1177 = vmul.f32 %v859, %v1049
      %v1178 = vmul.f32 %v861, %v1050
      %v1179 = vmul.f32 %v863, %v1051
      %v1180 = vmul.f32 %v865, %v1052
      %v1181 = vmul.f32 %v867, %v1053
      %v1182 = vmul.f32 %v869, %v1054
      %v1183 = vmul.f32 %v871, %v1055
      %v1184 = vmul.f32 %v873, %v1056
      %v1185 = vmul.f32 %v875, %v1057
      %v1186 = vmul.f32 %v877, %v1058
      %v1187 = vmul.f32 %v879, %v1059
      %v1188 = vmul.f32 %v881, %v1060
      %v1189 = vmul.f32 %v883, %v1061
      %v1190 = vmul.f32 %v885, %v1062
      %v1191 = vmul.f32 %v887, %v1063
      %v1192 = vmul.f32 %v889, %v1064
      %v1193 = vmul.f32 %v891, %v1065
      %v1194 = vmul.f32 %v893, %v1066
      %v1195 = vmul.f32 %v895, %v1067
      %v1196 = vmul.f32 %v897, %v1068
      %v1197 = vmul.f32 %v899, %v1069
      %v1198 = vmul.f32 %v901, %v1070
      %v1199 = vmul.f32 %v903, %v1071
      %v1200 = vmul.f32 %v905, %v1072
      %v1201 = vmul.f32 %v907, %v1073
      %v1202 = vmul.f32 %v909, %v1074
      %v1203 = vmul.f32 %v911, %v1075
      %v1204 = vmul.f32 %v913, %v1076
      %v1205 = vmul.f32 %v915, %v1077
      %v1206 = vmul.f32 %v917, %v1078
      %v1207 = vmul.f32 %v919, %v1079
      %v1208 = vmul.f32 %v921, %v1080
      %v1209 = vmul.f32 %v923, %v1081
      %v1210 = vmul.f32 %v925, %v1082
      %v1211 = vmul.f32 %v927, %v1083
      %v1212 = vmul.f32 %v929, %v1084
      %v1213 = vmul.f32 %v931, %v1085
      %v1214 = vmul.f32 %v933, %v1086
      %v1215 = vmul.f32 %v935, %v1087
      %v1216 = vmul.f32 %v937, %v1088
      %v1217 = vmul.f32 %v939, %v1089
      %v1218 = vmul.f32 %v941, %v1090
      %v1219 = vmul.f32 %v943, %v1091
      %v1220 = vmul.f32 %v945, %v1092
      %v1221 = vmul.f32 %v947, %v1093
      %v1222 = vmul.f32 %v949, %v1094
      %v1223 = vmul.f32 %v951, %v1095
      %v1224 = vmul.f32 %v953, %v1096
      %v1225 = vmul.f32 %v955, %v1097
      %v1226 = vmul.f32 %v957, %v1098
      %v1227 = vmul.f32 %v959, %v1099
      %v1228 = vmul.f32 %v961, %v1100
      %v1229 = vmul.f32 %v963, %v1101
      %v1230 = vmul.f32 %v965, %v1102
      %v1231 = vmul.f32 %v967, %v1103
      %v1232 = vmul.f32 %v969, %v1104
      %v1233 = vmul.f32 %v971, %v1105
      %v1234 = vmul.f32 %v973, %v1106
      %v1235 = vmul.f32 %v975, %v1107
      %v1236 = vmul.f32 %v977, %v1108
      %v1237 = vmul.f32 %v979, %v1109
      %v1238 = vmul.f32 %v981, %v1110
      %v1239 = vmul.f32 %v983, %v1111
      %v1240 = vsel %vm1112, %v1048, %v1176
      %v1241 = vsel %vm1113, %v1049, %v1177
      %v1242 = vsel %vm1114, %v1050, %v1178
      %v1243 = vsel %vm1115, %v1051, %v1179
      %v1244 = vsel %vm1116, %v1052, %v1180
      %v1245 = vsel %vm1117, %v1053, %v1181
      %v1246 = vsel %vm1118, %v1054, %v1182
      %v1247 = vsel %vm1119, %v1055, %v1183
      %v1248 = vsel %vm1120, %v1056, %v1184
      %v1249 = vsel %vm1121, %v1057, %v1185
      %v1250 = vsel %vm1122, %v1058, %v1186
      %v1251 = vsel %vm1123, %v1059, %v1187
      %v1252 = vsel %vm1124, %v1060, %v1188
      %v1253 = vsel %vm1125, %v1061, %v1189
      %v1254 = vsel %vm1126, %v1062, %v1190
      %v1255 = vsel %vm1127, %v1063, %v1191
      %v1256 = vsel %vm1128, %v1064, %v1192
      %v1257 = vsel %vm1129, %v1065, %v1193
      %v1258 = vsel %vm1130, %v1066, %v1194
      %v1259 = vsel %vm1131, %v1067, %v1195
      %v1260 = vsel %vm1132, %v1068, %v1196
      %v1261 = vsel %vm1133, %v1069, %v1197
      %v1262 = vsel %vm1134, %v1070, %v1198
      %v1263 = vsel %vm1135, %v1071, %v1199
      %v1264 = vsel %vm1136, %v1072, %v1200
      %v1265 = vsel %vm1137, %v1073, %v1201
      %v1266 = vsel %vm1138, %v1074, %v1202
      %v1267 = vsel %vm1139, %v1075, %v1203
      %v1268 = vsel %vm1140, %v1076, %v1204
      %v1269 = vsel %vm1141, %v1077, %v1205
      %v1270 = vsel %vm1142, %v1078, %v1206
      %v1271 = vsel %vm1143, %v1079, %v1207
      %v1272 = vsel %vm1144, %v1080, %v1208
      %v1273 = vsel %vm1145, %v1081, %v1209
      %v1274 = vsel %vm1146, %v1082, %v1210
      %v1275 = vsel %vm1147, %v1083, %v1211
      %v1276 = vsel %vm1148, %v1084, %v1212
      %v1277 = vsel %vm1149, %v1085, %v1213
      %v1278 = vsel %vm1150, %v1086, %v1214
      %v1279 = vsel %vm1151, %v1087, %v1215
      %v1280 = vsel %vm1152, %v1088, %v1216
      %v1281 = vsel %vm1153, %v1089, %v1217
      %v1282 = vsel %vm1154, %v1090, %v1218
      %v1283 = vsel %vm1155, %v1091, %v1219
      %v1284 = vsel %vm1156, %v1092, %v1220
      %v1285 = vsel %vm1157, %v1093, %v1221
      %v1286 = vsel %vm1158, %v1094, %v1222
      %v1287 = vsel %vm1159, %v1095, %v1223
      %v1288 = vsel %vm1160, %v1096, %v1224
      %v1289 = vsel %vm1161, %v1097, %v1225
      %v1290 = vsel %vm1162, %v1098, %v1226
      %v1291 = vsel %vm1163, %v1099, %v1227
      %v1292 = vsel %vm1164, %v1100, %v1228
      %v1293 = vsel %vm1165, %v1101, %v1229
      %v1294 = vsel %vm1166, %v1102, %v1230
      %v1295 = vsel %vm1167, %v1103, %v1231
      %v1296 = vsel %vm1168, %v1104, %v1232
      %v1297 = vsel %vm1169, %v1105, %v1233
      %v1298 = vsel %vm1170, %v1106, %v1234
      %v1299 = vsel %vm1171, %v1107, %v1235
      %v1300 = vsel %vm1172, %v1108, %v1236
      %v1301 = vsel %vm1173, %v1109, %v1237
      %v1302 = vsel %vm1174, %v1110, %v1238
      %v1303 = vsel %vm1175, %v1111, %v1239
      %v1304 = vmul.f32 %v569, %v1240
      %v1305 = vmul.f32 %v571, %v1241
      %v1306 = vmul.f32 %v574, %v1242
      %v1307 = vmul.f32 %v576, %v1243
      %v1308 = vmul.f32 %v579, %v1244
      %v1309 = vmul.f32 %v581, %v1245
      %v1310 = vmul.f32 %v584, %v1246
      %v1311 = vmul.f32 %v586, %v1247
      %v1312 = vmul.f32 %v589, %v1248
      %v1313 = vmul.f32 %v591, %v1249
      %v1314 = vmul.f32 %v594, %v1250
      %v1315 = vmul.f32 %v596, %v1251
      %v1316 = vmul.f32 %v599, %v1252
      %v1317 = vmul.f32 %v601, %v1253
      %v1318 = vmul.f32 %v604, %v1254
      %v1319 = vmul.f32 %v606, %v1255
      %v1320 = vmul.f32 %v609, %v1256
      %v1321 = vmul.f32 %v611, %v1257
      %v1322 = vmul.f32 %v614, %v1258
      %v1323 = vmul.f32 %v616, %v1259
      %v1324 = vmul.f32 %v619, %v1260
      %v1325 = vmul.f32 %v621, %v1261
      %v1326 = vmul.f32 %v624, %v1262
      %v1327 = vmul.f32 %v626, %v1263
      %v1328 = vmul.f32 %v629, %v1264
      %v1329 = vmul.f32 %v631, %v1265
      %v1330 = vmul.f32 %v634, %v1266
      %v1331 = vmul.f32 %v636, %v1267
      %v1332 = vmul.f32 %v639, %v1268
      %v1333 = vmul.f32 %v641, %v1269
      %v1334 = vmul.f32 %v644, %v1270
      %v1335 = vmul.f32 %v646, %v1271
      %v1336 = vmul.f32 %v649, %v1272
      %v1337 = vmul.f32 %v651, %v1273
      %v1338 = vmul.f32 %v654, %v1274
      %v1339 = vmul.f32 %v656, %v1275
      %v1340 = vmul.f32 %v659, %v1276
      %v1341 = vmul.f32 %v661, %v1277
      %v1342 = vmul.f32 %v664, %v1278
      %v1343 = vmul.f32 %v666, %v1279
      %v1344 = vmul.f32 %v669, %v1280
      %v1345 = vmul.f32 %v671, %v1281
      %v1346 = vmul.f32 %v674, %v1282
      %v1347 = vmul.f32 %v676, %v1283
      %v1348 = vmul.f32 %v679, %v1284
      %v1349 = vmul.f32 %v681, %v1285
      %v1350 = vmul.f32 %v684, %v1286
      %v1351 = vmul.f32 %v686, %v1287
      %v1352 = vmul.f32 %v689, %v1288
      %v1353 = vmul.f32 %v691, %v1289
      %v1354 = vmul.f32 %v694, %v1290
      %v1355 = vmul.f32 %v696, %v1291
      %v1356 = vmul.f32 %v699, %v1292
      %v1357 = vmul.f32 %v701, %v1293
      %v1358 = vmul.f32 %v704, %v1294
      %v1359 = vmul.f32 %v706, %v1295
      %v1360 = vmul.f32 %v709, %v1296
      %v1361 = vmul.f32 %v711, %v1297
      %v1362 = vmul.f32 %v714, %v1298
      %v1363 = vmul.f32 %v716, %v1299
      %v1364 = vmul.f32 %v719, %v1300
      %v1365 = vmul.f32 %v721, %v1301
      %v1366 = vmul.f32 %v724, %v1302
      %v1367 = vmul.f32 %v726, %v1303
      %v1368 = vpack.c.bf16 %v1304, %v1304
      %v1369 = vpack.c.bf16 %v1305, %v1305
      %v1370 = vpack.c.bf16 %v1306, %v1306
      %v1371 = vpack.c.bf16 %v1307, %v1307
      %v1372 = vpack.c.bf16 %v1308, %v1308
      %v1373 = vpack.c.bf16 %v1309, %v1309
      %v1374 = vpack.c.bf16 %v1310, %v1310
      %v1375 = vpack.c.bf16 %v1311, %v1311
      %v1376 = vpack.c.bf16 %v1312, %v1312
      %v1377 = vpack.c.bf16 %v1313, %v1313
      %v1378 = vpack.c.bf16 %v1314, %v1314
      %v1379 = vpack.c.bf16 %v1315, %v1315
      %v1380 = vpack.c.bf16 %v1316, %v1316
      %v1381 = vpack.c.bf16 %v1317, %v1317
      %v1382 = vpack.c.bf16 %v1318, %v1318
      %v1383 = vpack.c.bf16 %v1319, %v1319
      %v1384 = vpack.c.bf16 %v1320, %v1320
      %v1385 = vpack.c.bf16 %v1321, %v1321
      %v1386 = vpack.c.bf16 %v1322, %v1322
      %v1387 = vpack.c.bf16 %v1323, %v1323
      %v1388 = vpack.c.bf16 %v1324, %v1324
      %v1389 = vpack.c.bf16 %v1325, %v1325
      %v1390 = vpack.c.bf16 %v1326, %v1326
      %v1391 = vpack.c.bf16 %v1327, %v1327
      %v1392 = vpack.c.bf16 %v1328, %v1328
      %v1393 = vpack.c.bf16 %v1329, %v1329
      %v1394 = vpack.c.bf16 %v1330, %v1330
      %v1395 = vpack.c.bf16 %v1331, %v1331
      %v1396 = vpack.c.bf16 %v1332, %v1332
      %v1397 = vpack.c.bf16 %v1333, %v1333
      %v1398 = vpack.c.bf16 %v1334, %v1334
      %v1399 = vpack.c.bf16 %v1335, %v1335
      %v1400 = vpack.c.bf16 %v1336, %v1336
      %v1401 = vpack.c.bf16 %v1337, %v1337
      %v1402 = vpack.c.bf16 %v1338, %v1338
      %v1403 = vpack.c.bf16 %v1339, %v1339
      %v1404 = vpack.c.bf16 %v1340, %v1340
      %v1405 = vpack.c.bf16 %v1341, %v1341
      %v1406 = vpack.c.bf16 %v1342, %v1342
      %v1407 = vpack.c.bf16 %v1343, %v1343
      %v1408 = vpack.c.bf16 %v1344, %v1344
      %v1409 = vpack.c.bf16 %v1345, %v1345
      %v1410 = vpack.c.bf16 %v1346, %v1346
      %v1411 = vpack.c.bf16 %v1347, %v1347
      %v1412 = vpack.c.bf16 %v1348, %v1348
      %v1413 = vpack.c.bf16 %v1349, %v1349
      %v1414 = vpack.c.bf16 %v1350, %v1350
      %v1415 = vpack.c.bf16 %v1351, %v1351
      %v1416 = vpack.c.bf16 %v1352, %v1352
      %v1417 = vpack.c.bf16 %v1353, %v1353
      %v1418 = vpack.c.bf16 %v1354, %v1354
      %v1419 = vpack.c.bf16 %v1355, %v1355
      %v1420 = vpack.c.bf16 %v1356, %v1356
      %v1421 = vpack.c.bf16 %v1357, %v1357
      %v1422 = vpack.c.bf16 %v1358, %v1358
      %v1423 = vpack.c.bf16 %v1359, %v1359
      %v1424 = vpack.c.bf16 %v1360, %v1360
      %v1425 = vpack.c.bf16 %v1361, %v1361
      %v1426 = vpack.c.bf16 %v1362, %v1362
      %v1427 = vpack.c.bf16 %v1363, %v1363
      %v1428 = vpack.c.bf16 %v1364, %v1364
      %v1429 = vpack.c.bf16 %v1365, %v1365
      %v1430 = vpack.c.bf16 %v1366, %v1366
      %v1431 = vpack.c.bf16 %v1367, %v1367
      %vm1432 = vcmask 125952
      %1433 = vst.msk [vmem:[%s172] sm:$0xf] %vm1432, %v1368
      %1434 = vst.msk [vmem:[%s172 + $0x4] sm:$0xf] %vm1432, %v1369
      %1435 = vst.msk [vmem:[%s172 + $0x8] sm:$0xf] %vm1432, %v1370
      %1436 = vst.msk [vmem:[%s172 + $0xc] sm:$0xf] %vm1432, %v1371
      %1437 = vst.msk [vmem:[%s172 + $0x10] sm:$0xf] %vm1432, %v1372
      %1438 = vst.msk [vmem:[%s172 + $0x14] sm:$0xf] %vm1432, %v1373
      %1439 = vst.msk [vmem:[%s172 + $0x18] sm:$0xf] %vm1432, %v1374
      %1440 = vst.msk [vmem:[%s172 + $0x1c] sm:$0xf] %vm1432, %v1375
      %1441 = vst.msk [vmem:[%s172 + $0x20] sm:$0xf] %vm1432, %v1376
      %1442 = vst.msk [vmem:[%s172 + $0x24] sm:$0xf] %vm1432, %v1377
      %1443 = vst.msk [vmem:[%s172 + $0x28] sm:$0xf] %vm1432, %v1378
      %1444 = vst.msk [vmem:[%s172 + $0x2c] sm:$0xf] %vm1432, %v1379
      %1445 = vst.msk [vmem:[%s172 + $0x30] sm:$0xf] %vm1432, %v1380
      %1446 = vst.msk [vmem:[%s172 + $0x34] sm:$0xf] %vm1432, %v1381
      %1447 = vst.msk [vmem:[%s172 + $0x38] sm:$0xf] %vm1432, %v1382
      %1448 = vst.msk [vmem:[%s172 + $0x3c] sm:$0xf] %vm1432, %v1383
      %1449 = vst.msk [vmem:[%s172 + $0x40] sm:$0xf] %vm1432, %v1384
      %1450 = vst.msk [vmem:[%s172 + $0x44] sm:$0xf] %vm1432, %v1385
      %1451 = vst.msk [vmem:[%s172 + $0x48] sm:$0xf] %vm1432, %v1386
      %1452 = vst.msk [vmem:[%s172 + $0x4c] sm:$0xf] %vm1432, %v1387
      %1453 = vst.msk [vmem:[%s172 + $0x50] sm:$0xf] %vm1432, %v1388
      %1454 = vst.msk [vmem:[%s172 + $0x54] sm:$0xf] %vm1432, %v1389
      %1455 = vst.msk [vmem:[%s172 + $0x58] sm:$0xf] %vm1432, %v1390
      %1456 = vst.msk [vmem:[%s172 + $0x5c] sm:$0xf] %vm1432, %v1391
      %1457 = vst.msk [vmem:[%s172 + $0x60] sm:$0xf] %vm1432, %v1392
      %1458 = vst.msk [vmem:[%s172 + $0x64] sm:$0xf] %vm1432, %v1393
      %1459 = vst.msk [vmem:[%s172 + $0x68] sm:$0xf] %vm1432, %v1394
      %1460 = vst.msk [vmem:[%s172 + $0x6c] sm:$0xf] %vm1432, %v1395
      %1461 = vst.msk [vmem:[%s172 + $0x70] sm:$0xf] %vm1432, %v1396
      %1462 = vst.msk [vmem:[%s172 + $0x74] sm:$0xf] %vm1432, %v1397
      %1463 = vst.msk [vmem:[%s172 + $0x78] sm:$0xf] %vm1432, %v1398
      %1464 = vst.msk [vmem:[%s172 + $0x7c] sm:$0xf] %vm1432, %v1399
      %1465 = vst.msk [vmem:[%s172 + $0x80] sm:$0xf] %vm1432, %v1400
      %1466 = vst.msk [vmem:[%s172 + $0x84] sm:$0xf] %vm1432, %v1401
      %1467 = vst.msk [vmem:[%s172 + $0x88] sm:$0xf] %vm1432, %v1402
      %1468 = vst.msk [vmem:[%s172 + $0x8c] sm:$0xf] %vm1432, %v1403
      %1469 = vst.msk [vmem:[%s172 + $0x90] sm:$0xf] %vm1432, %v1404
      %1470 = vst.msk [vmem:[%s172 + $0x94] sm:$0xf] %vm1432, %v1405
      %1471 = vst.msk [vmem:[%s172 + $0x98] sm:$0xf] %vm1432, %v1406
      %1472 = vst.msk [vmem:[%s172 + $0x9c] sm:$0xf] %vm1432, %v1407
      %1473 = vst.msk [vmem:[%s172 + $0xa0] sm:$0xf] %vm1432, %v1408
      %1474 = vst.msk [vmem:[%s172 + $0xa4] sm:$0xf] %vm1432, %v1409
      %1475 = vst.msk [vmem:[%s172 + $0xa8] sm:$0xf] %vm1432, %v1410
      %1476 = vst.msk [vmem:[%s172 + $0xac] sm:$0xf] %vm1432, %v1411
      %1477 = vst.msk [vmem:[%s172 + $0xb0] sm:$0xf] %vm1432, %v1412
      %1478 = vst.msk [vmem:[%s172 + $0xb4] sm:$0xf] %vm1432, %v1413
      %1479 = vst.msk [vmem:[%s172 + $0xb8] sm:$0xf] %vm1432, %v1414
      %1480 = vst.msk [vmem:[%s172 + $0xbc] sm:$0xf] %vm1432, %v1415
      %1481 = vst.msk [vmem:[%s172 + $0xc0] sm:$0xf] %vm1432, %v1416
      %1482 = vst.msk [vmem:[%s172 + $0xc4] sm:$0xf] %vm1432, %v1417
      %1483 = vst.msk [vmem:[%s172 + $0xc8] sm:$0xf] %vm1432, %v1418
      %1484 = vst.msk [vmem:[%s172 + $0xcc] sm:$0xf] %vm1432, %v1419
      %1485 = vst.msk [vmem:[%s172 + $0xd0] sm:$0xf] %vm1432, %v1420
      %1486 = vst.msk [vmem:[%s172 + $0xd4] sm:$0xf] %vm1432, %v1421
      %1487 = vst.msk [vmem:[%s172 + $0xd8] sm:$0xf] %vm1432, %v1422
      %1488 = vst.msk [vmem:[%s172 + $0xdc] sm:$0xf] %vm1432, %v1423
      %1489 = vst.msk [vmem:[%s172 + $0xe0] sm:$0xf] %vm1432, %v1424
      %1490 = vst.msk [vmem:[%s172 + $0xe4] sm:$0xf] %vm1432, %v1425
      %1491 = vst.msk [vmem:[%s172 + $0xe8] sm:$0xf] %vm1432, %v1426
      %1492 = vst.msk [vmem:[%s172 + $0xec] sm:$0xf] %vm1432, %v1427
      %1493 = vst.msk [vmem:[%s172 + $0xf0] sm:$0xf] %vm1432, %v1428
      %1494 = vst.msk [vmem:[%s172 + $0xf4] sm:$0xf] %vm1432, %v1429
      %1495 = vst.msk [vmem:[%s172 + $0xf8] sm:$0xf] %vm1432, %v1430
      %1496 = vst.msk [vmem:[%s172 + $0xfc] sm:$0xf] %vm1432, %v1431
      %s1497 = smul.u32 64, %s14
      %p1498 = scmp.lt.s32.totalorder %s1497, 255
      %s1499 = scalar_select %p1498, %s1497, 255
      %s1500 = smul.addr %s1499, 4
      %s1501 = scalar_lea.vmem %s3, %s1500
      // Predicated region
      $region33: #{tpu_custom_call.1} parent=31 // pred_check
        %p1502 = pneg %p100
      $region34: #{tpu_custom_call.1} parent=31 // pred_check_branch
        %1504 = sbr.rel (%p1502) target = $region36
      $region35: #{tpu_custom_call.1} parent=31 // pred_region
        %s1505 = smul.u32 64, %s14
      $region36: #{tpu_custom_call.1} parent=31 // pred_fallthru
        _
    $region32: #{tpu_custom_call.1} parent=5 // pred_fallthru
      _
    %p1506 = scmp.le.s32.totalorder 2, %s9
    // Predicated region
    $region37: #{tpu_custom_call.1} parent=5 // pred_check
      %p1507 = pneg %p1506
    $region38: #{tpu_custom_call.1} parent=5 // pred_check_branch
      %1509 = sbr.rel (%p1507) target = $region40
    $region39: #{tpu_custom_call.1} parent=5 // pred_region
      %s1510 = ssub.s32 %s9, 2
      // Predicated region
      $region41: #{tpu_custom_call.1} parent=39 // pred_check
        %p1511 = pneg %p106
      $region42: #{tpu_custom_call.1} parent=39 // pred_check_branch
        %1513 = sbr.rel (%p1511) target = $region44
      $region43: #{tpu_custom_call.1} parent=39 // pred_region
        %s1514 = smul.u32 64, %s15
        %p1515 = scmp.lt.s32.totalorder %s1514, 255
        %s1516 = scalar_select %p1515, %s1514, 255
        %s1517 = smul.addr %s1516, 4
        %s1518 = scalar_lea.vmem %s3, %s1517
      $region44: #{tpu_custom_call.1} parent=39 // pred_fallthru
        _
    $region40: #{tpu_custom_call.1} parent=5 // pred_fallthru
      _
  $region6: #{tpu_custom_call.1} parent=0 // loop_footer
    %s13 = sadd.s32 1, %s9
  $region7: #{tpu_custom_call.1} parent=0 // loop_footer_branch
    %8 = sbr.rel target = $region3
  $region8: #{tpu_custom_call.1} parent=0 // loop_exit
    _

</llo_original>
